<compile_context>
chip_gen: v7x
topology: tpu7x:2x2x1
jax: 0.10.0
libtpu: 0.0.40
codegen_flags: <defaults>
</compile_context>

<pallas_src>
import functools

import jax
import jax.numpy as jnp
from jax.experimental import pallas as pl
from jax.experimental.pallas import tpu as pltpu


def _round_up(v, m):
    return (v + m - 1) // m * m


def _nbytes(*arrays):
    return int(sum(a.size * a.dtype.itemsize for a in arrays))


def _silu(z):
    # One EUP transcendental per element: sigmoid(z) = 0.5 * (tanh(z/2) + 1).
    return z * (0.5 * jnp.tanh(0.5 * z) + 0.5)


# ---------------------------------------------------------------------------
# Pallas kernel: 3-layer SiLU MLP over a row tile.  Shared by the edge
# (message) and node (update) MLPs -- the first Linear-on-a-concat has been
# fused into a single K=128 bf16 matmul on the wrapper side.
# ---------------------------------------------------------------------------
def _mlp3_kernel(x_ref, w1_ref, b1_ref, w2_ref, b2_ref, w3_ref, b3_ref, o_ref):
    f32, bf16 = jnp.float32, jnp.bfloat16
    h = _silu(jnp.dot(x_ref[...], w1_ref[...], preferred_element_type=f32)
              + b1_ref[...])
    h = _silu(jnp.dot(h.astype(bf16), w2_ref[...], preferred_element_type=f32)
              + b2_ref[...])
    o_ref[...] = (jnp.dot(h.astype(bf16), w3_ref[...], preferred_element_type=f32)
                  + b3_ref[...])


def _pick_tile(rows, max_tile):
    """Row-tile size: multiple of 16 (bf16 sublane pack), <= max_tile, and an
    even number of tiles when possible so the 'parallel' grid axis balances
    across v7x's two TensorCores."""
    r = _round_up(max(rows, 1), 16)
    if r <= 16:
        return r
    n_tiles = max(2, 2 * ((pl.cdiv(r, max_tile) + 1) // 2))
    return min(max_tile, _round_up(pl.cdiv(r, n_tiles), 16))


def _row_tiled_mlp(x_slab, weights, out_cols, tile_rows,
                   flops_per_row, transc_per_row):
    """Run the shared 3-layer MLP kernel over row tiles; weights whole-resident."""
    rows, K = x_slab.shape
    num_tiles = rows // tile_rows
    in_specs = [pl.BlockSpec((tile_rows, K), lambda i: (i, 0))]
    in_specs += [pl.BlockSpec(w.shape, lambda i: (0, 0)) for w in weights]
    cost = pl.CostEstimate(
        flops=int(rows * flops_per_row),
        transcendentals=int(rows * transc_per_row),
        bytes_accessed=_nbytes(x_slab, *weights) + rows * out_cols * 4)
    return pl.pallas_call(
        _mlp3_kernel,
        grid=(num_tiles,),
        in_specs=in_specs,
        out_specs=pl.BlockSpec((tile_rows, out_cols), lambda i: (i, 0)),
        out_shape=jax.ShapeDtypeStruct((rows, out_cols), jnp.float32),
        compiler_params=pltpu.CompilerParams(
            dimension_semantics=("parallel",)),
        cost_estimate=cost,
    )(x_slab, *weights)


# ---------------------------------------------------------------------------
# One-time parameter prep: fuse / zero-pad / bf16-cast (hoisted out of forward)
# ---------------------------------------------------------------------------
def prepare_params(params):
    (w1i, w1j, w1e, b1, w2, b2, w3, b3,
     v1x, v1m, c1, v2, c2, v3, c3, wl, bl) = params
    bf16 = jnp.bfloat16
    H = w2.shape[0]
    Hp = _round_up(H, 128)                 # 300 -> 384 (3x128, exact)
    Ke = _round_up(w1i.shape[0] + w1j.shape[0] + w1e.shape[0], 128)
    Kn = _round_up(v1x.shape[0] + v1m.shape[0], 128)

    def pad_to(a, shape):
        return jnp.pad(a, [(0, s - d) for d, s in zip(a.shape, shape)])

    edge_w = (
        pad_to(jnp.concatenate([w1i, w1j, w1e], axis=0), (Ke, Hp)).astype(bf16),
        pad_to(b1, (1, Hp)),
        pad_to(w2, (Hp, Hp)).astype(bf16),
        pad_to(b2, (1, Hp)),
        pad_to(w3, (Hp, w3.shape[1])).astype(bf16),
        b3,
    )
    node_w = (
        pad_to(jnp.concatenate([v1x, v1m], axis=0), (Kn, Hp)).astype(bf16),
        pad_to(c1, (1, Hp)),
        pad_to(v2, (Hp, Hp)).astype(bf16),
        pad_to(c2, (1, Hp)),
        pad_to(v3, (Hp, v3.shape[1])).astype(bf16),
        c3,
    )
    return edge_w, node_w, (wl, bl)


# ---------------------------------------------------------------------------
# Forward pass
# ---------------------------------------------------------------------------
@functools.partial(jax.jit,
                   static_argnames=("num_graphs", "edge_tile", "node_tile"))
def gnpoolswish_forward(prepped, x, edge_index, edge_attr, batch, num_graphs,
                        edge_tile=1024, node_tile=1024):
    edge_w, node_w, (wl, bl) = prepped
    N, n_nf = x.shape
    E, n_ef = edge_attr.shape
    Ke, Hp = edge_w[0].shape
    Kn = node_w[0].shape[0]
    msg_dim = edge_w[4].shape[1]
    n_hidden = node_w[4].shape[1]
    bf16 = jnp.bfloat16

    send = edge_index[0].astype(jnp.int32)   # x_j (source)
    recv = edge_index[1].astype(jnp.int32)   # x_i (target / aggregation index)
    batch = batch.astype(jnp.int32)

    # ---- message phase: fused [x_i | x_j | e_ij | 0] slab -> Pallas MLP ----
    te = _pick_tile(E, edge_tile)
    Ep = _round_up(E, te)
    slab_e = jnp.concatenate(
        [jnp.take(x, recv, axis=0), jnp.take(x, send, axis=0), edge_attr],
        axis=1)
    slab_e = jnp.pad(slab_e,
                     ((0, Ep - E), (0, Ke - slab_e.shape[1]))).astype(bf16)
    msg = _row_tiled_mlp(
        slab_e, edge_w, msg_dim, te,
        flops_per_row=2 * (Ke * Hp + Hp * Hp + Hp * msg_dim),
        transc_per_row=2 * Hp)                                   # [Ep, msg_dim]

    # ---- aggr='add': scatter-add messages onto target nodes (XLA glue).
    # Padded edge rows produce nonzero MLP output (bias propagation), so they
    # are routed to the extra dropped segment at index Np. ----
    tn = _pick_tile(N, node_tile)
    Np = _round_up(N, tn)
    recv_pad = jnp.concatenate([recv, jnp.full((Ep - E,), Np, jnp.int32)])
    aggr = jax.ops.segment_sum(msg, recv_pad, num_segments=Np + 1)[:Np]

    # ---- update phase: fused [x | aggr | 0] slab -> Pallas MLP ----
    slab_n = jnp.concatenate(
        [jnp.pad(x, ((0, Np - N), (0, 0))), aggr], axis=1)
    slab_n = jnp.pad(slab_n, ((0, 0), (0, Kn - slab_n.shape[1]))).astype(bf16)
    node_out = _row_tiled_mlp(
        slab_n, node_w, n_hidden, tn,
        flops_per_row=2 * (Kn * Hp + Hp * Hp + Hp * n_hidden),
        transc_per_row=2 * Hp)                                   # [Np, n_hidden]

    # ---- global_mean_pool + dropout(eval) + tiny head (XLA) ----
    batch_pad = jnp.concatenate([batch,
                                 jnp.full((Np - N,), num_graphs, jnp.int32)])
    sums = jax.ops.segment_sum(node_out, batch_pad,
                               num_segments=num_graphs + 1)[:num_graphs]
    counts = jax.ops.segment_sum(jnp.ones((N,), jnp.float32), batch,
                                 num_segments=num_graphs)
    pooled = sums / jnp.maximum(counts, 1.0)[:, None]
    # TODO(synk): F.dropout(p=0.5) treated as identity (inference semantics).
    return pooled @ wl + bl


# ---------------------------------------------------------------------------
# Parameter init (PyTorch Linear layout, then transposed/split like the module)
# ---------------------------------------------------------------------------
def init_params(key, n_nf, n_ef, msg_dim, n_hidden, n_predict, hidden=300):
    ks = jax.random.split(key, 7)

    def lin(k, fan_in, fan_out):
        kw, kb = jax.random.split(k)
        lim = 1.0 / jnp.sqrt(jnp.float32(fan_in))
        W = jax.random.uniform(kw, (fan_out, fan_in), jnp.float32, -lim, lim)
        b = jax.random.uniform(kb, (fan_out,), jnp.float32, -lim, lim)
        return W, b

    # GNswish.msg_fnc
    W1, b1 = lin(ks[0], 2 * n_nf + n_ef, hidden)
    W2, b2 = lin(ks[1], hidden, hidden)
    W3, b3 = lin(ks[2], hidden, msg_dim)
    # GNswish.node_fnc (npredict = n_hidden inside GNpoolswish)
    V1, c1 = lin(ks[3], msg_dim + n_nf, hidden)
    V2, c2 = lin(ks[4], hidden, hidden)
    V3, c3 = lin(ks[5], hidden, n_hidden)
    # GNpoolswish.lin
    Wl, bl = lin(ks[6], n_hidden, n_predict)

    return (
        W1[:, :n_nf].T, W1[:, n_nf:2 * n_nf].T, W1[:, 2 * n_nf:].T, b1[None, :],
        W2.T, b2[None, :], W3.T, b3[None, :],
        V1[:, :n_nf].T, V1[:, n_nf:].T, c1[None, :],
        V2.T, c2[None, :], V3.T, c3[None, :],
        Wl.T, bl[None, :],
    )


def _reference(params, x, edge_index, edge_attr, batch, num_graphs):
    (w1i, w1j, w1e, b1, w2, b2, w3, b3,
     v1x, v1m, c1, v2, c2, v3, c3, wl, bl) = params
    xi = x[edge_index[1]]
    xj = x[edge_index[0]]
    h = jax.nn.silu(xi @ w1i + xj @ w1j + edge_attr @ w1e + b1)
    h = jax.nn.silu(h @ w2 + b2)
    msg = h @ w3 + b3
    aggr = jax.ops.segment_sum(msg, edge_index[1], num_segments=x.shape[0])
    g = jax.nn.silu(x @ v1x + aggr @ v1m + c1)
    g = jax.nn.silu(g @ v2 + c2)
    node_out = g @ v3 + c3
    sums = jax.ops.segment_sum(node_out, batch, num_segments=num_graphs)
    counts = jax.ops.segment_sum(jnp.ones((x.shape[0],), jnp.float32), batch,
                                 num_segments=num_graphs)
    pooled = sums / jnp.maximum(counts, 1.0)[:, None]
    return pooled @ wl + bl


if __name__ == "__main__":
    # Small, module-consistent shapes.
    N, E, G = 8, 16, 2
    n_nf, n_ef, msg_dim, n_hidden, n_predict = 4, 3, 8, 16, 2
    hidden = 300  # GNswish default (padded to 384 inside prepare_params)

    key = jax.random.PRNGKey(0)
    kx, ke, ks0, kd0, ks1, kd1, kp = jax.random.split(key, 7)

    x = jax.random.normal(kx, (N, n_nf), jnp.float32)
    edge_attr = jax.random.normal(ke, (E, n_ef), jnp.float32)

    # Graph 0 = nodes 0..3, graph 1 = nodes 4..7; edges stay within graphs.
    batch = jnp.array([0, 0, 0, 0, 1, 1, 1, 1], dtype=jnp.int32)
    src = jnp.concatenate([jax.random.randint(ks0, (E // 2,), 0, 4),
                           jax.random.randint(ks1, (E // 2,), 4, 8)]).astype(jnp.int32)
    dst = jnp.concatenate([jax.random.randint(kd0, (E // 2,), 0, 4),
                           jax.random.randint(kd1, (E // 2,), 4, 8)]).astype(jnp.int32)
    edge_index = jnp.stack([src, dst])  # [2, E]

    params = init_params(kp, n_nf, n_ef, msg_dim, n_hidden, n_predict,
                         hidden=hidden)
    prepped = prepare_params(params)   # one-time pad/fuse/bf16 cast

    out = gnpoolswish_forward(prepped, x, edge_index, edge_attr, batch,
                              num_graphs=G)
    out = jax.block_until_ready(out)

    ref = _reference(params, x, edge_index, edge_attr, batch, G)
    assert out.shape == (G, n_predict)
    assert jnp.allclose(out, ref, rtol=2e-2, atol=2e-2), (out, ref)

    print("KERNEL_OK")
</pallas_src>

<mosaic_0001>
module attributes {stable_mosaic.version = 11 : i64} {
  func.func @_mlp3_kernel(%arg0: i32, %arg1: memref<16x128xbf16, #tpu.memory_space<vmem>>, %arg2: memref<128x384xbf16, #tpu.memory_space<vmem>>, %arg3: memref<1x384xf32, #tpu.memory_space<vmem>>, %arg4: memref<384x384xbf16, #tpu.memory_space<vmem>>, %arg5: memref<1x384xf32, #tpu.memory_space<vmem>>, %arg6: memref<384x8xbf16, #tpu.memory_space<vmem>>, %arg7: memref<1x8xf32, #tpu.memory_space<vmem>>, %arg8: memref<16x8xf32, #tpu.memory_space<vmem>>) attributes {dimension_semantics = [#tpu.dimension_semantics<parallel>], iteration_bounds = array<i64: 1>, scalar_prefetch = 0 : i64, scratch_operands = 0 : i64, tpu.core_type = #tpu.core_type<tc>, window_params = [{transform_indices = @transform_0, window_bounds = array<i64: 16, 128>}, {pipeline_mode = #tpu.pipeline_mode<synchronous>, transform_indices = @transform_1, window_bounds = array<i64: 128, 384>}, {pipeline_mode = #tpu.pipeline_mode<synchronous>, transform_indices = @transform_2, window_bounds = array<i64: 1, 384>}, {pipeline_mode = #tpu.pipeline_mode<synchronous>, transform_indices = @transform_3, window_bounds = array<i64: 384, 384>}, {pipeline_mode = #tpu.pipeline_mode<synchronous>, transform_indices = @transform_4, window_bounds = array<i64: 1, 384>}, {pipeline_mode = #tpu.pipeline_mode<synchronous>, transform_indices = @transform_5, window_bounds = array<i64: 384, 8>}, {pipeline_mode = #tpu.pipeline_mode<synchronous>, transform_indices = @transform_6, window_bounds = array<i64: 1, 8>}, {transform_indices = @transform_7, window_bounds = array<i64: 16, 8>}]} {
    %c0 = arith.constant 0 : index
    %c0_0 = arith.constant 0 : index
    %0 = vector.load %arg1[%c0, %c0_0] : memref<16x128xbf16, #tpu.memory_space<vmem>>, vector<16x128xbf16>
    %c0_1 = arith.constant 0 : index
    %c0_2 = arith.constant 0 : index
    %1 = vector.load %arg2[%c0_1, %c0_2] : memref<128x384xbf16, #tpu.memory_space<vmem>>, vector<128x384xbf16>
    %cst = arith.constant dense<0.000000e+00> : vector<16x384xf32>
    %2 = tpu.matmul %0, %1, %cst {dimension_numbers = #tpu.dot_dimension_numbers<[1], [0], [0], [1], [0, 0, 1, 1], [], []>} : vector<16x128xbf16>, vector<128x384xbf16>, vector<16x384xf32> -> vector<16x384xf32>
    %c0_3 = arith.constant 0 : index
    %c0_4 = arith.constant 0 : index
    %3 = vector.load %arg3[%c0_3, %c0_4] : memref<1x384xf32, #tpu.memory_space<vmem>>, vector<1x384xf32>
    %4 = vector.broadcast %3 : vector<1x384xf32> to vector<16x384xf32>
    %5 = arith.addf %2, %4 : vector<16x384xf32>
    %cst_5 = arith.constant 5.000000e-01 : f32
    %6 = vector.broadcast %cst_5 : f32 to vector<16x384xf32>
    %7 = arith.mulf %6, %5 : vector<16x384xf32>
    %8 = math.tanh %7 : vector<16x384xf32>
    %cst_6 = arith.constant 5.000000e-01 : f32
    %9 = vector.broadcast %cst_6 : f32 to vector<16x384xf32>
    %10 = arith.mulf %9, %8 : vector<16x384xf32>
    %cst_7 = arith.constant 5.000000e-01 : f32
    %11 = vector.broadcast %cst_7 : f32 to vector<16x384xf32>
    %12 = arith.addf %10, %11 : vector<16x384xf32>
    %13 = arith.mulf %5, %12 : vector<16x384xf32>
    %14 = arith.truncf %13 : vector<16x384xf32> to vector<16x384xbf16>
    %c0_8 = arith.constant 0 : index
    %c0_9 = arith.constant 0 : index
    %15 = vector.load %arg4[%c0_8, %c0_9] : memref<384x384xbf16, #tpu.memory_space<vmem>>, vector<384x384xbf16>
    %cst_10 = arith.constant dense<0.000000e+00> : vector<16x384xf32>
    %16 = tpu.matmul %14, %15, %cst_10 {dimension_numbers = #tpu.dot_dimension_numbers<[1], [0], [0], [1], [0, 0, 1, 1], [], []>} : vector<16x384xbf16>, vector<384x384xbf16>, vector<16x384xf32> -> vector<16x384xf32>
    %c0_11 = arith.constant 0 : index
    %c0_12 = arith.constant 0 : index
    %17 = vector.load %arg5[%c0_11, %c0_12] : memref<1x384xf32, #tpu.memory_space<vmem>>, vector<1x384xf32>
    %18 = vector.broadcast %17 : vector<1x384xf32> to vector<16x384xf32>
    %19 = arith.addf %16, %18 : vector<16x384xf32>
    %cst_13 = arith.constant 5.000000e-01 : f32
    %20 = vector.broadcast %cst_13 : f32 to vector<16x384xf32>
    %21 = arith.mulf %20, %19 : vector<16x384xf32>
    %22 = math.tanh %21 : vector<16x384xf32>
    %cst_14 = arith.constant 5.000000e-01 : f32
    %23 = vector.broadcast %cst_14 : f32 to vector<16x384xf32>
    %24 = arith.mulf %23, %22 : vector<16x384xf32>
    %cst_15 = arith.constant 5.000000e-01 : f32
    %25 = vector.broadcast %cst_15 : f32 to vector<16x384xf32>
    %26 = arith.addf %24, %25 : vector<16x384xf32>
    %27 = arith.mulf %19, %26 : vector<16x384xf32>
    %28 = arith.truncf %27 : vector<16x384xf32> to vector<16x384xbf16>
    %c0_16 = arith.constant 0 : index
    %c0_17 = arith.constant 0 : index
    %29 = vector.load %arg6[%c0_16, %c0_17] : memref<384x8xbf16, #tpu.memory_space<vmem>>, vector<384x8xbf16>
    %cst_18 = arith.constant dense<0.000000e+00> : vector<16x8xf32>
    %30 = tpu.matmul %28, %29, %cst_18 {dimension_numbers = #tpu.dot_dimension_numbers<[1], [0], [0], [1], [0, 0, 1, 1], [], []>} : vector<16x384xbf16>, vector<384x8xbf16>, vector<16x8xf32> -> vector<16x8xf32>
    %c0_19 = arith.constant 0 : index
    %c0_20 = arith.constant 0 : index
    %31 = vector.load %arg7[%c0_19, %c0_20] : memref<1x8xf32, #tpu.memory_space<vmem>>, vector<1x8xf32>
    %32 = vector.broadcast %31 : vector<1x8xf32> to vector<16x8xf32>
    %33 = arith.addf %30, %32 : vector<16x8xf32>
    %c0_21 = arith.constant 0 : index
    %c0_22 = arith.constant 0 : index
    %34 = vector.load %arg8[%c0_21, %c0_22] : memref<16x8xf32, #tpu.memory_space<vmem>>, vector<16x8xf32>
    tpu.vector_store %arg8[%c0_21, %c0_22], %33 {strides = array<i32>} : memref<16x8xf32, #tpu.memory_space<vmem>>, vector<16x8xf32>,
    return
  }
  func.func @transform_0(%arg0: i32) -> (i32, i32) {
    %c0_i32 = arith.constant 0 : i32
    %c0_i32_0 = arith.constant 0 : i32
    return %arg0, %c0_i32 : i32, i32
  }
  func.func @transform_1(%arg0: i32) -> (i32, i32) {
    %c0_i32 = arith.constant 0 : i32
    %c0_i32_0 = arith.constant 0 : i32
    %c0_i32_1 = arith.constant 0 : i32
    return %c0_i32, %c0_i32_0 : i32, i32
  }
  func.func @transform_2(%arg0: i32) -> (i32, i32) {
    %c0_i32 = arith.constant 0 : i32
    %c0_i32_0 = arith.constant 0 : i32
    %c0_i32_1 = arith.constant 0 : i32
    return %c0_i32, %c0_i32_0 : i32, i32
  }
  func.func @transform_3(%arg0: i32) -> (i32, i32) {
    %c0_i32 = arith.constant 0 : i32
    %c0_i32_0 = arith.constant 0 : i32
    %c0_i32_1 = arith.constant 0 : i32
    return %c0_i32, %c0_i32_0 : i32, i32
  }
  func.func @transform_4(%arg0: i32) -> (i32, i32) {
    %c0_i32 = arith.constant 0 : i32
    %c0_i32_0 = arith.constant 0 : i32
    %c0_i32_1 = arith.constant 0 : i32
    return %c0_i32, %c0_i32_0 : i32, i32
  }
  func.func @transform_5(%arg0: i32) -> (i32, i32) {
    %c0_i32 = arith.constant 0 : i32
    %c0_i32_0 = arith.constant 0 : i32
    %c0_i32_1 = arith.constant 0 : i32
    return %c0_i32, %c0_i32_0 : i32, i32
  }
  func.func @transform_6(%arg0: i32) -> (i32, i32) {
    %c0_i32 = arith.constant 0 : i32
    %c0_i32_0 = arith.constant 0 : i32
    %c0_i32_1 = arith.constant 0 : i32
    return %c0_i32, %c0_i32_0 : i32, i32
  }
  func.func @transform_7(%arg0: i32) -> (i32, i32) {
    %c0_i32 = arith.constant 0 : i32
    %c0_i32_0 = arith.constant 0 : i32
    return %arg0, %c0_i32 : i32, i32
  }
}

module attributes {stable_mosaic.version = 11 : i64} {
  func.func @_mlp3_kernel(%arg0: i32, %arg1: memref<16x128xbf16, #tpu.memory_space<vmem>>, %arg2: memref<128x384xbf16, #tpu.memory_space<vmem>>, %arg3: memref<1x384xf32, #tpu.memory_space<vmem>>, %arg4: memref<384x384xbf16, #tpu.memory_space<vmem>>, %arg5: memref<1x384xf32, #tpu.memory_space<vmem>>, %arg6: memref<384x16xbf16, #tpu.memory_space<vmem>>, %arg7: memref<1x16xf32, #tpu.memory_space<vmem>>, %arg8: memref<16x16xf32, #tpu.memory_space<vmem>>) attributes {dimension_semantics = [#tpu.dimension_semantics<parallel>], iteration_bounds = array<i64: 1>, scalar_prefetch = 0 : i64, scratch_operands = 0 : i64, tpu.core_type = #tpu.core_type<tc>, window_params = [{transform_indices = @transform_0, window_bounds = array<i64: 16, 128>}, {pipeline_mode = #tpu.pipeline_mode<synchronous>, transform_indices = @transform_1, window_bounds = array<i64: 128, 384>}, {pipeline_mode = #tpu.pipeline_mode<synchronous>, transform_indices = @transform_2, window_bounds = array<i64: 1, 384>}, {pipeline_mode = #tpu.pipeline_mode<synchronous>, transform_indices = @transform_3, window_bounds = array<i64: 384, 384>}, {pipeline_mode = #tpu.pipeline_mode<synchronous>, transform_indices = @transform_4, window_bounds = array<i64: 1, 384>}, {pipeline_mode = #tpu.pipeline_mode<synchronous>, transform_indices = @transform_5, window_bounds = array<i64: 384, 16>}, {pipeline_mode = #tpu.pipeline_mode<synchronous>, transform_indices = @transform_6, window_bounds = array<i64: 1, 16>}, {transform_indices = @transform_7, window_bounds = array<i64: 16, 16>}]} {
    %c0 = arith.constant 0 : index
    %c0_0 = arith.constant 0 : index
    %0 = vector.load %arg1[%c0, %c0_0] : memref<16x128xbf16, #tpu.memory_space<vmem>>, vector<16x128xbf16>
    %c0_1 = arith.constant 0 : index
    %c0_2 = arith.constant 0 : index
    %1 = vector.load %arg2[%c0_1, %c0_2] : memref<128x384xbf16, #tpu.memory_space<vmem>>, vector<128x384xbf16>
    %cst = arith.constant dense<0.000000e+00> : vector<16x384xf32>
    %2 = tpu.matmul %0, %1, %cst {dimension_numbers = #tpu.dot_dimension_numbers<[1], [0], [0], [1], [0, 0, 1, 1], [], []>} : vector<16x128xbf16>, vector<128x384xbf16>, vector<16x384xf32> -> vector<16x384xf32>
    %c0_3 = arith.constant 0 : index
    %c0_4 = arith.constant 0 : index
    %3 = vector.load %arg3[%c0_3, %c0_4] : memref<1x384xf32, #tpu.memory_space<vmem>>, vector<1x384xf32>
    %4 = vector.broadcast %3 : vector<1x384xf32> to vector<16x384xf32>
    %5 = arith.addf %2, %4 : vector<16x384xf32>
    %cst_5 = arith.constant 5.000000e-01 : f32
    %6 = vector.broadcast %cst_5 : f32 to vector<16x384xf32>
    %7 = arith.mulf %6, %5 : vector<16x384xf32>
    %8 = math.tanh %7 : vector<16x384xf32>
    %cst_6 = arith.constant 5.000000e-01 : f32
    %9 = vector.broadcast %cst_6 : f32 to vector<16x384xf32>
    %10 = arith.mulf %9, %8 : vector<16x384xf32>
    %cst_7 = arith.constant 5.000000e-01 : f32
    %11 = vector.broadcast %cst_7 : f32 to vector<16x384xf32>
    %12 = arith.addf %10, %11 : vector<16x384xf32>
    %13 = arith.mulf %5, %12 : vector<16x384xf32>
    %14 = arith.truncf %13 : vector<16x384xf32> to vector<16x384xbf16>
    %c0_8 = arith.constant 0 : index
    %c0_9 = arith.constant 0 : index
    %15 = vector.load %arg4[%c0_8, %c0_9] : memref<384x384xbf16, #tpu.memory_space<vmem>>, vector<384x384xbf16>
    %cst_10 = arith.constant dense<0.000000e+00> : vector<16x384xf32>
    %16 = tpu.matmul %14, %15, %cst_10 {dimension_numbers = #tpu.dot_dimension_numbers<[1], [0], [0], [1], [0, 0, 1, 1], [], []>} : vector<16x384xbf16>, vector<384x384xbf16>, vector<16x384xf32> -> vector<16x384xf32>
    %c0_11 = arith.constant 0 : index
    %c0_12 = arith.constant 0 : index
    %17 = vector.load %arg5[%c0_11, %c0_12] : memref<1x384xf32, #tpu.memory_space<vmem>>, vector<1x384xf32>
    %18 = vector.broadcast %17 : vector<1x384xf32> to vector<16x384xf32>
    %19 = arith.addf %16, %18 : vector<16x384xf32>
    %cst_13 = arith.constant 5.000000e-01 : f32
    %20 = vector.broadcast %cst_13 : f32 to vector<16x384xf32>
    %21 = arith.mulf %20, %19 : vector<16x384xf32>
    %22 = math.tanh %21 : vector<16x384xf32>
    %cst_14 = arith.constant 5.000000e-01 : f32
    %23 = vector.broadcast %cst_14 : f32 to vector<16x384xf32>
    %24 = arith.mulf %23, %22 : vector<16x384xf32>
    %cst_15 = arith.constant 5.000000e-01 : f32
    %25 = vector.broadcast %cst_15 : f32 to vector<16x384xf32>
    %26 = arith.addf %24, %25 : vector<16x384xf32>
    %27 = arith.mulf %19, %26 : vector<16x384xf32>
    %28 = arith.truncf %27 : vector<16x384xf32> to vector<16x384xbf16>
    %c0_16 = arith.constant 0 : index
    %c0_17 = arith.constant 0 : index
    %29 = vector.load %arg6[%c0_16, %c0_17] : memref<384x16xbf16, #tpu.memory_space<vmem>>, vector<384x16xbf16>
    %cst_18 = arith.constant dense<0.000000e+00> : vector<16x16xf32>
    %30 = tpu.matmul %28, %29, %cst_18 {dimension_numbers = #tpu.dot_dimension_numbers<[1], [0], [0], [1], [0, 0, 1, 1], [], []>} : vector<16x384xbf16>, vector<384x16xbf16>, vector<16x16xf32> -> vector<16x16xf32>
    %c0_19 = arith.constant 0 : index
    %c0_20 = arith.constant 0 : index
    %31 = vector.load %arg7[%c0_19, %c0_20] : memref<1x16xf32, #tpu.memory_space<vmem>>, vector<1x16xf32>
    %32 = vector.broadcast %31 : vector<1x16xf32> to vector<16x16xf32>
    %33 = arith.addf %30, %32 : vector<16x16xf32>
    %c0_21 = arith.constant 0 : index
    %c0_22 = arith.constant 0 : index
    %34 = vector.load %arg8[%c0_21, %c0_22] : memref<16x16xf32, #tpu.memory_space<vmem>>, vector<16x16xf32>
    tpu.vector_store %arg8[%c0_21, %c0_22], %33 {strides = array<i32>} : memref<16x16xf32, #tpu.memory_space<vmem>>, vector<16x16xf32>,
    return
  }
  func.func @transform_0(%arg0: i32) -> (i32, i32) {
    %c0_i32 = arith.constant 0 : i32
    %c0_i32_0 = arith.constant 0 : i32
    return %arg0, %c0_i32 : i32, i32
  }
  func.func @transform_1(%arg0: i32) -> (i32, i32) {
    %c0_i32 = arith.constant 0 : i32
    %c0_i32_0 = arith.constant 0 : i32
    %c0_i32_1 = arith.constant 0 : i32
    return %c0_i32, %c0_i32_0 : i32, i32
  }
  func.func @transform_2(%arg0: i32) -> (i32, i32) {
    %c0_i32 = arith.constant 0 : i32
    %c0_i32_0 = arith.constant 0 : i32
    %c0_i32_1 = arith.constant 0 : i32
    return %c0_i32, %c0_i32_0 : i32, i32
  }
  func.func @transform_3(%arg0: i32) -> (i32, i32) {
    %c0_i32 = arith.constant 0 : i32
    %c0_i32_0 = arith.constant 0 : i32
    %c0_i32_1 = arith.constant 0 : i32
    return %c0_i32, %c0_i32_0 : i32, i32
  }
  func.func @transform_4(%arg0: i32) -> (i32, i32) {
    %c0_i32 = arith.constant 0 : i32
    %c0_i32_0 = arith.constant 0 : i32
    %c0_i32_1 = arith.constant 0 : i32
    return %c0_i32, %c0_i32_0 : i32, i32
  }
  func.func @transform_5(%arg0: i32) -> (i32, i32) {
    %c0_i32 = arith.constant 0 : i32
    %c0_i32_0 = arith.constant 0 : i32
    %c0_i32_1 = arith.constant 0 : i32
    return %c0_i32, %c0_i32_0 : i32, i32
  }
  func.func @transform_6(%arg0: i32) -> (i32, i32) {
    %c0_i32 = arith.constant 0 : i32
    %c0_i32_0 = arith.constant 0 : i32
    %c0_i32_1 = arith.constant 0 : i32
    return %c0_i32, %c0_i32_0 : i32, i32
  }
  func.func @transform_7(%arg0: i32) -> (i32, i32) {
    %c0_i32 = arith.constant 0 : i32
    %c0_i32_0 = arith.constant 0 : i32
    return %arg0, %c0_i32 : i32, i32
  }
}

</mosaic_0001>

<llo_original>
// kernel: gnpoolswish_forward.3
$region0: #{gnpoolswish_forward.3}
  #allocation0 [shape = 'u32[]', space=smem, size = 0x4, offset = 0x4, fixed_abs, tag = 'smem constant byte address 0x4 - core index']
  #allocation1 [shape = 'u32[144,128]{1,0:T(1,128)}', space=vmem, size = 0x12000, scoped, tag = 'internal scratch']
  %s0 = inlined_call_operand.vmem [shape: bf16[16,128], index: 0, kind: input, shape index: {}]
  %s1 = inlined_call_operand.vmem [shape: bf16[128,384], index: 1, kind: input, shape index: {}]
  %s2 = inlined_call_operand.vmem [shape: f32[1,384], index: 2, kind: input, shape index: {}]
  %s3 = inlined_call_operand.vmem [shape: bf16[384,384], index: 3, kind: input, shape index: {}]
  %s4 = inlined_call_operand.vmem [shape: f32[1,384], index: 4, kind: input, shape index: {}]
  %s5 = inlined_call_operand.vmem [shape: bf16[384,16], index: 5, kind: input, shape index: {}]
  %s6 = inlined_call_operand.vmem [shape: f32[1,16], index: 6, kind: input, shape index: {}]
  %s7 = inlined_call_operand.vmem [shape: f32[16,16], index: 7, kind: output, shape index: {}]
  %s8 = sld [smem:[#allocation0]]
  $region38: #{gnpoolswish_forward.3} parent=0
    _
  %s10 = ssub.s32 1, %s8
  %s11 = scalar_select 0, %s10, %s8
  // Predicated region
  $region2: #{gnpoolswish_forward.3} parent=0 // pred_check
    _
  $region3: #{gnpoolswish_forward.3} parent=0 // pred_check_branch
    %13 = sbr.rel (0) target = $region5
  $region4: #{gnpoolswish_forward.3} parent=0 // pred_region
    _
  $region5: #{gnpoolswish_forward.3} parent=0 // pred_fallthru
    _
  // Predicated region
  $region6: #{gnpoolswish_forward.3} parent=0 // pred_check
    _
  $region7: #{gnpoolswish_forward.3} parent=0 // pred_check_branch
    %15 = sbr.rel (0) target = $region9
  $region8: #{gnpoolswish_forward.3} parent=0 // pred_region
    _
  $region9: #{gnpoolswish_forward.3} parent=0 // pred_fallthru
    _
  // Predicated region
  $region10: #{gnpoolswish_forward.3} parent=0 // pred_check
    _
  $region11: #{gnpoolswish_forward.3} parent=0 // pred_check_branch
    %17 = sbr.rel (0) target = $region13
  $region12: #{gnpoolswish_forward.3} parent=0 // pred_region
    _
  $region13: #{gnpoolswish_forward.3} parent=0 // pred_fallthru
    _
  // Predicated region
  $region14: #{gnpoolswish_forward.3} parent=0 // pred_check
    _
  $region15: #{gnpoolswish_forward.3} parent=0 // pred_check_branch
    %19 = sbr.rel (0) target = $region17
  $region16: #{gnpoolswish_forward.3} parent=0 // pred_region
    _
  $region17: #{gnpoolswish_forward.3} parent=0 // pred_fallthru
    _
  // Predicated region
  $region18: #{gnpoolswish_forward.3} parent=0 // pred_check
    _
  $region19: #{gnpoolswish_forward.3} parent=0 // pred_check_branch
    %21 = sbr.rel (0) target = $region21
  $region20: #{gnpoolswish_forward.3} parent=0 // pred_region
    _
  $region21: #{gnpoolswish_forward.3} parent=0 // pred_fallthru
    _
  // Predicated region
  $region22: #{gnpoolswish_forward.3} parent=0 // pred_check
    _
  $region23: #{gnpoolswish_forward.3} parent=0 // pred_check_branch
    %23 = sbr.rel (0) target = $region25
  $region24: #{gnpoolswish_forward.3} parent=0 // pred_region
    _
  $region25: #{gnpoolswish_forward.3} parent=0 // pred_fallthru
    _
  // Predicated region
  $region26: #{gnpoolswish_forward.3} parent=0 // pred_check
    _
  $region27: #{gnpoolswish_forward.3} parent=0 // pred_check_branch
    %25 = sbr.rel (0) target = $region29
  $region28: #{gnpoolswish_forward.3} parent=0 // pred_region
    _
  $region29: #{gnpoolswish_forward.3} parent=0 // pred_fallthru
    _
  %v27 = vld [vmem:[%s0] sm:$0xf]
  %v28 = vld [vmem:[%s0 + $0x4] sm:$0xf]
  %v29 = vld [vmem:[%s1] sm:$0xff]
  %v30 = vld [vmem:[%s1 + $0x8] sm:$0xf]
  %v31 = vld [vmem:[%s1 + $0xc] sm:$0xff]
  %v32 = vld [vmem:[%s1 + $0x14] sm:$0xf]
  %v33 = vld [vmem:[%s1 + $0x18] sm:$0xff]
  %v34 = vld [vmem:[%s1 + $0x20] sm:$0xf]
  %v35 = vld [vmem:[%s1 + $0x24] sm:$0xff]
  %v36 = vld [vmem:[%s1 + $0x2c] sm:$0xf]
  %v37 = vld [vmem:[%s1 + $0x30] sm:$0xff]
  %v38 = vld [vmem:[%s1 + $0x38] sm:$0xf]
  %v39 = vld [vmem:[%s1 + $0x3c] sm:$0xff]
  %v40 = vld [vmem:[%s1 + $0x44] sm:$0xf]
  %v41 = vld [vmem:[%s1 + $0x48] sm:$0xff]
  %v42 = vld [vmem:[%s1 + $0x50] sm:$0xf]
  %v43 = vld [vmem:[%s1 + $0x54] sm:$0xff]
  %v44 = vld [vmem:[%s1 + $0x5c] sm:$0xf]
  %v45 = vld [vmem:[%s1 + $0x60] sm:$0xff]
  %v46 = vld [vmem:[%s1 + $0x68] sm:$0xf]
  %v47 = vld [vmem:[%s1 + $0x6c] sm:$0xff]
  %v48 = vld [vmem:[%s1 + $0x74] sm:$0xf]
  %v49 = vld [vmem:[%s1 + $0x78] sm:$0xff]
  %v50 = vld [vmem:[%s1 + $0x80] sm:$0xf]
  %v51 = vld [vmem:[%s1 + $0x84] sm:$0xff]
  %v52 = vld [vmem:[%s1 + $0x8c] sm:$0xf]
  %v53 = vld [vmem:[%s1 + $0x90] sm:$0xff]
  %v54 = vld [vmem:[%s1 + $0x98] sm:$0xf]
  %v55 = vld [vmem:[%s1 + $0x9c] sm:$0xff]
  %v56 = vld [vmem:[%s1 + $0xa4] sm:$0xf]
  %v57 = vld [vmem:[%s1 + $0xa8] sm:$0xff]
  %v58 = vld [vmem:[%s1 + $0xb0] sm:$0xf]
  %v59 = vld [vmem:[%s1 + $0xb4] sm:$0xff]
  %v60 = vld [vmem:[%s1 + $0xbc] sm:$0xf]
  %v61 = vld [vmem:[%s2] sm:$0x7]
  %v63 = vlaneseq
  %v64 = vshrl.u32 %v63, 7
  %v65 = vsub.s32 0, %v64
  %v66 = vrot.slane %v61, %v65
  %v67 = vlaneseq
  %v68 = vshrl.u32 %v67, 7
  %v69 = vsub.s32 1, %v68
  %v70 = vrot.slane %v61, %v69
  %v71 = vlaneseq
  %v72 = vshrl.u32 %v71, 7
  %v73 = vsub.s32 2, %v72
  %v74 = vrot.slane %v61, %v73
  %v80 = vunpack.c.l.b16 %v27
  %v81 = vunpack.c.l.b16 %v28
  %v82 = vpack.c.b16 %v81, %v80
  %v116 = vunpack.c.l.b16 %v29
  %v117 = vunpack.c.h.b16 %v29
  %v118 = vunpack.c.l.b16 %v30
  %v119 = vunpack.c.l.b16 %v31
  %v120 = vunpack.c.h.b16 %v31
  %v121 = vunpack.c.l.b16 %v32
  %v122 = vunpack.c.l.b16 %v33
  %v123 = vunpack.c.h.b16 %v33
  %v124 = vunpack.c.l.b16 %v34
  %v125 = vunpack.c.l.b16 %v35
  %v126 = vunpack.c.h.b16 %v35
  %v127 = vunpack.c.l.b16 %v36
  %v128 = vunpack.c.l.b16 %v37
  %v129 = vunpack.c.h.b16 %v37
  %v130 = vunpack.c.l.b16 %v38
  %v131 = vunpack.c.l.b16 %v39
  %v132 = vunpack.c.h.b16 %v39
  %v133 = vunpack.c.l.b16 %v40
  %v134 = vunpack.c.l.b16 %v41
  %v135 = vunpack.c.h.b16 %v41
  %v136 = vunpack.c.l.b16 %v42
  %v137 = vunpack.c.l.b16 %v43
  %v138 = vunpack.c.h.b16 %v43
  %v139 = vunpack.c.l.b16 %v44
  %v140 = vunpack.c.l.b16 %v45
  %v141 = vunpack.c.h.b16 %v45
  %v142 = vunpack.c.l.b16 %v46
  %v143 = vunpack.c.l.b16 %v47
  %v144 = vunpack.c.h.b16 %v47
  %v145 = vunpack.c.l.b16 %v48
  %v146 = vunpack.c.l.b16 %v49
  %v147 = vunpack.c.h.b16 %v49
  %v148 = vunpack.c.l.b16 %v50
  %v149 = vunpack.c.l.b16 %v51
  %v150 = vunpack.c.h.b16 %v51
  %v151 = vunpack.c.l.b16 %v52
  %v152 = vunpack.c.l.b16 %v53
  %v153 = vunpack.c.h.b16 %v53
  %v154 = vunpack.c.l.b16 %v54
  %v155 = vunpack.c.l.b16 %v55
  %v156 = vunpack.c.h.b16 %v55
  %v157 = vunpack.c.l.b16 %v56
  %v158 = vunpack.c.l.b16 %v57
  %v159 = vunpack.c.h.b16 %v57
  %v160 = vunpack.c.l.b16 %v58
  %v161 = vunpack.c.l.b16 %v59
  %v162 = vunpack.c.h.b16 %v59
  %v163 = vunpack.c.l.b16 %v60
  %v164 = vpack.c.b16 %v119, %v116
  %v165 = vpack.c.b16 %v120, %v117
  %v166 = vpack.c.b16 %v121, %v118
  %v167 = vpack.c.b16 %v125, %v122
  %v168 = vpack.c.b16 %v126, %v123
  %v169 = vpack.c.b16 %v127, %v124
  %v170 = vpack.c.b16 %v131, %v128
  %v171 = vpack.c.b16 %v132, %v129
  %v172 = vpack.c.b16 %v133, %v130
  %v173 = vpack.c.b16 %v137, %v134
  %v174 = vpack.c.b16 %v138, %v135
  %v175 = vpack.c.b16 %v139, %v136
  %v176 = vpack.c.b16 %v143, %v140
  %v177 = vpack.c.b16 %v144, %v141
  %v178 = vpack.c.b16 %v145, %v142
  %v179 = vpack.c.b16 %v149, %v146
  %v180 = vpack.c.b16 %v150, %v147
  %v181 = vpack.c.b16 %v151, %v148
  %v182 = vpack.c.b16 %v155, %v152
  %v183 = vpack.c.b16 %v156, %v153
  %v184 = vpack.c.b16 %v157, %v154
  %v185 = vpack.c.b16 %v161, %v158
  %v186 = vpack.c.b16 %v162, %v159
  %v187 = vpack.c.b16 %v163, %v160
  %212 = vmatprep.subr.bf16.mxu0 %v165
  %213 = vmatpush1.bf16.msra.mxu0 %v164
  %214 = vmatprep.subr.bf16.mxu0 %v168
  %215 = vmatpush1.bf16.msra.mxu0 %v167
  %216 = vmatprep.subr.bf16.mxu0 %v171
  %217 = vmatpush1.bf16.msra.mxu0 %v170
  %218 = vmatprep.subr.bf16.mxu0 %v174
  %219 = vmatpush1.bf16.msra.mxu0 %v173
  %220 = vmatprep.subr.bf16.mxu0 %v177
  %221 = vmatpush1.bf16.msra.mxu0 %v176
  %222 = vmatprep.subr.bf16.mxu0 %v180
  %223 = vmatpush1.bf16.msra.mxu0 %v179
  %224 = vmatprep.subr.bf16.mxu0 %v183
  %225 = vmatpush1.bf16.msra.mxu0 %v182
  %226 = vmatprep.subr.bf16.mxu0 %v186
  %227 = vmatpush1.bf16.msra.mxu0 %v185
  %228 = vmatprep.subr.bf16.mxu0 0
  %229 = vmatpush1.bf16.msra.mxu0 0
  %230 = vmatprep.subr.bf16.mxu0 0
  %231 = vmatpush1.bf16.msra.mxu0 0
  %232 = vmatprep.subr.bf16.mxu0 0
  %233 = vmatpush1.bf16.msra.mxu0 0
  %234 = vmatprep.subr.bf16.mxu0 0
  %235 = vmatpush1.bf16.msra.mxu0 0
  %236 = vmatprep.subr.bf16.mxu0 0
  %237 = vmatpush1.bf16.msra.mxu0 0
  %238 = vmatprep.subr.bf16.mxu0 0
  %239 = vmatpush1.bf16.msra.mxu0 0
  %240 = vmatprep.subr.bf16.mxu0 0
  %241 = vmatpush1.bf16.msra.mxu0 0
  %242 = vmatprep.subr.bf16.mxu0 0
  %243 = vmatpush1.bf16.msra.mxu0 0
  %244 = vmatprep.mubr.bf16.mxu0 0
  %245 = vmatmul.mubr.bf16.gmra.mrb[0].mxu0 %v82
  %v246 = vpop.f32.mrb[0].mxu0
  %v247 = vadd.f32 %v66, %v246
  %v248 = vpop.f32.mrb[0].mxu0
  %v249 = vadd.f32 %v70, %v248
  %v250 = vpop.f32.mrb[0].mxu0
  %v251 = vadd.f32 %v66, %v250
  %v252 = vpop.f32.mrb[0].mxu0
  %v253 = vadd.f32 %v70, %v252
  %254 = vdwg.mxu0
  %255 = vmatprep.subr.bf16.mxu0 0
  %256 = vmatpush1.bf16.msra.mxu0 %v166
  %257 = vmatprep.subr.bf16.mxu0 0
  %258 = vmatpush1.bf16.msra.mxu0 %v169
  %259 = vmatprep.subr.bf16.mxu0 0
  %260 = vmatpush1.bf16.msra.mxu0 %v172
  %261 = vmatprep.subr.bf16.mxu0 0
  %262 = vmatpush1.bf16.msra.mxu0 %v175
  %263 = vmatprep.subr.bf16.mxu0 0
  %264 = vmatpush1.bf16.msra.mxu0 %v178
  %265 = vmatprep.subr.bf16.mxu0 0
  %266 = vmatpush1.bf16.msra.mxu0 %v181
  %267 = vmatprep.subr.bf16.mxu0 0
  %268 = vmatpush1.bf16.msra.mxu0 %v184
  %269 = vmatprep.subr.bf16.mxu0 0
  %270 = vmatpush1.bf16.msra.mxu0 %v187
  %271 = vmatprep.subr.bf16.mxu0 0
  %272 = vmatpush1.bf16.msra.mxu0 0
  %273 = vmatprep.subr.bf16.mxu0 0
  %274 = vmatpush1.bf16.msra.mxu0 0
  %275 = vmatprep.subr.bf16.mxu0 0
  %276 = vmatpush1.bf16.msra.mxu0 0
  %277 = vmatprep.subr.bf16.mxu0 0
  %278 = vmatpush1.bf16.msra.mxu0 0
  %279 = vmatprep.subr.bf16.mxu0 0
  %280 = vmatpush1.bf16.msra.mxu0 0
  %281 = vmatprep.subr.bf16.mxu0 0
  %282 = vmatpush1.bf16.msra.mxu0 0
  %283 = vmatprep.subr.bf16.mxu0 0
  %284 = vmatpush1.bf16.msra.mxu0 0
  %285 = vmatprep.subr.bf16.mxu0 0
  %286 = vmatpush1.bf16.msra.mxu0 0
  %287 = vmatprep.mubr.bf16.mxu0 0
  %288 = vmatmul.mubr.bf16.gmra.mrb[0].mxu0 %v82
  %v289 = vpop.f32.mrb[0].mxu0
  %v290 = vadd.f32 %v74, %v289
  %v291 = vpop.f32.mrb[0].mxu0
  %v292 = vpop.f32.mrb[0].mxu0
  %v293 = vadd.f32 %v74, %v292
  %v294 = vpop.f32.mrb[0].mxu0
  %295 = vdwg.mxu0
  %v296 = vmul.f32 %v247, 0.5
  %v297 = vmul.f32 %v249, 0.5
  %v298 = vmul.f32 %v290, 0.5
  %v299 = vmul.f32 %v251, 0.5
  %v300 = vmul.f32 %v253, 0.5
  %v301 = vmul.f32 %v293, 0.5
  %v302 = vtanh.pop %v296
  %v303 = vtanh.pop %v297
  %v304 = vtanh.pop %v298
  %v305 = vtanh.pop %v299
  %v306 = vtanh.pop %v300
  %v307 = vtanh.pop %v301
  %v308 = vmul.f32 %v302, 0.5
  %v309 = vmul.f32 %v303, 0.5
  %v310 = vmul.f32 %v304, 0.5
  %v311 = vmul.f32 %v305, 0.5
  %v312 = vmul.f32 %v306, 0.5
  %v313 = vmul.f32 %v307, 0.5
  %v314 = vadd.f32 %v308, 0.5
  %v315 = vadd.f32 %v309, 0.5
  %v316 = vadd.f32 %v310, 0.5
  %v317 = vadd.f32 %v311, 0.5
  %v318 = vadd.f32 %v312, 0.5
  %v319 = vadd.f32 %v313, 0.5
  %v320 = vmul.f32 %v247, %v314
  %v321 = vmul.f32 %v249, %v315
  %v322 = vmul.f32 %v290, %v316
  %v323 = vmul.f32 %v251, %v317
  %v324 = vmul.f32 %v253, %v318
  %v325 = vmul.f32 %v293, %v319
  %v326 = vpack.c.bf16 %v323, %v320
  %v327 = vpack.c.bf16 %v324, %v321
  %v328 = vpack.c.bf16 %v325, %v322
  %v329 = vld [vmem:[%s3] sm:$0xff]
  %v330 = vld [vmem:[%s3 + $0x8] sm:$0xf]
  %v331 = vld [vmem:[%s3 + $0xc] sm:$0xff]
  %v332 = vld [vmem:[%s3 + $0x14] sm:$0xf]
  %v333 = vld [vmem:[%s3 + $0x18] sm:$0xff]
  %v334 = vld [vmem:[%s3 + $0x20] sm:$0xf]
  %v335 = vld [vmem:[%s3 + $0x24] sm:$0xff]
  %v336 = vld [vmem:[%s3 + $0x2c] sm:$0xf]
  %v337 = vld [vmem:[%s3 + $0x30] sm:$0xff]
  %v338 = vld [vmem:[%s3 + $0x38] sm:$0xf]
  %v339 = vld [vmem:[%s3 + $0x3c] sm:$0xff]
  %v340 = vld [vmem:[%s3 + $0x44] sm:$0xf]
  %v341 = vld [vmem:[%s3 + $0x48] sm:$0xff]
  %v342 = vld [vmem:[%s3 + $0x50] sm:$0xf]
  %v343 = vld [vmem:[%s3 + $0x54] sm:$0xff]
  %v344 = vld [vmem:[%s3 + $0x5c] sm:$0xf]
  %v345 = vld [vmem:[%s3 + $0x60] sm:$0xff]
  %v346 = vld [vmem:[%s3 + $0x68] sm:$0xf]
  %v347 = vld [vmem:[%s3 + $0x6c] sm:$0xff]
  %v348 = vld [vmem:[%s3 + $0x74] sm:$0xf]
  %v349 = vld [vmem:[%s3 + $0x78] sm:$0xff]
  %v350 = vld [vmem:[%s3 + $0x80] sm:$0xf]
  %v351 = vld [vmem:[%s3 + $0x84] sm:$0xff]
  %v352 = vld [vmem:[%s3 + $0x8c] sm:$0xf]
  %v353 = vld [vmem:[%s3 + $0x90] sm:$0xff]
  %v354 = vld [vmem:[%s3 + $0x98] sm:$0xf]
  %v355 = vld [vmem:[%s3 + $0x9c] sm:$0xff]
  %v356 = vld [vmem:[%s3 + $0xa4] sm:$0xf]
  %v357 = vld [vmem:[%s3 + $0xa8] sm:$0xff]
  %v358 = vld [vmem:[%s3 + $0xb0] sm:$0xf]
  %v359 = vld [vmem:[%s3 + $0xb4] sm:$0xff]
  %v360 = vld [vmem:[%s3 + $0xbc] sm:$0xf]
  %v361 = vld [vmem:[%s3 + $0xc0] sm:$0xff]
  %v362 = vld [vmem:[%s3 + $0xc8] sm:$0xf]
  %v363 = vld [vmem:[%s3 + $0xcc] sm:$0xff]
  %v364 = vld [vmem:[%s3 + $0xd4] sm:$0xf]
  %v365 = vld [vmem:[%s3 + $0xd8] sm:$0xff]
  %v366 = vld [vmem:[%s3 + $0xe0] sm:$0xf]
  %v367 = vld [vmem:[%s3 + $0xe4] sm:$0xff]
  %v368 = vld [vmem:[%s3 + $0xec] sm:$0xf]
  %v369 = vld [vmem:[%s3 + $0xf0] sm:$0xff]
  %v370 = vld [vmem:[%s3 + $0xf8] sm:$0xf]
  %v371 = vld [vmem:[%s3 + $0xfc] sm:$0xff]
  %v372 = vld [vmem:[%s3 + $0x104] sm:$0xf]
  %v373 = vld [vmem:[%s3 + $0x108] sm:$0xff]
  %v374 = vld [vmem:[%s3 + $0x110] sm:$0xf]
  %v375 = vld [vmem:[%s3 + $0x114] sm:$0xff]
  %v376 = vld [vmem:[%s3 + $0x11c] sm:$0xf]
  %v377 = vld [vmem:[%s3 + $0x120] sm:$0xff]
  %v378 = vld [vmem:[%s3 + $0x128] sm:$0xf]
  %v379 = vld [vmem:[%s3 + $0x12c] sm:$0xff]
  %v380 = vld [vmem:[%s3 + $0x134] sm:$0xf]
  %v381 = vld [vmem:[%s3 + $0x138] sm:$0xff]
  %v382 = vld [vmem:[%s3 + $0x140] sm:$0xf]
  %v383 = vld [vmem:[%s3 + $0x144] sm:$0xff]
  %v384 = vld [vmem:[%s3 + $0x14c] sm:$0xf]
  %v385 = vld [vmem:[%s3 + $0x150] sm:$0xff]
  %v386 = vld [vmem:[%s3 + $0x158] sm:$0xf]
  %v387 = vld [vmem:[%s3 + $0x15c] sm:$0xff]
  %v388 = vld [vmem:[%s3 + $0x164] sm:$0xf]
  %v389 = vld [vmem:[%s3 + $0x168] sm:$0xff]
  %v390 = vld [vmem:[%s3 + $0x170] sm:$0xf]
  %v391 = vld [vmem:[%s3 + $0x174] sm:$0xff]
  %v392 = vld [vmem:[%s3 + $0x17c] sm:$0xf]
  %v393 = vld [vmem:[%s3 + $0x180] sm:$0xff]
  %v394 = vld [vmem:[%s3 + $0x188] sm:$0xf]
  %v395 = vld [vmem:[%s3 + $0x18c] sm:$0xff]
  %v396 = vld [vmem:[%s3 + $0x194] sm:$0xf]
  %v397 = vld [vmem:[%s3 + $0x198] sm:$0xff]
  %v398 = vld [vmem:[%s3 + $0x1a0] sm:$0xf]
  %v399 = vld [vmem:[%s3 + $0x1a4] sm:$0xff]
  %v400 = vld [vmem:[%s3 + $0x1ac] sm:$0xf]
  %v401 = vld [vmem:[%s3 + $0x1b0] sm:$0xff]
  %v402 = vld [vmem:[%s3 + $0x1b8] sm:$0xf]
  %v403 = vld [vmem:[%s3 + $0x1bc] sm:$0xff]
  %v404 = vld [vmem:[%s3 + $0x1c4] sm:$0xf]
  %v405 = vld [vmem:[%s3 + $0x1c8] sm:$0xff]
  %v406 = vld [vmem:[%s3 + $0x1d0] sm:$0xf]
  %v407 = vld [vmem:[%s3 + $0x1d4] sm:$0xff]
  %v408 = vld [vmem:[%s3 + $0x1dc] sm:$0xf]
  %v409 = vld [vmem:[%s3 + $0x1e0] sm:$0xff]
  %v410 = vld [vmem:[%s3 + $0x1e8] sm:$0xf]
  %v411 = vld [vmem:[%s3 + $0x1ec] sm:$0xff]
  %v412 = vld [vmem:[%s3 + $0x1f4] sm:$0xf]
  %v413 = vld [vmem:[%s3 + $0x1f8] sm:$0xff]
  %v414 = vld [vmem:[%s3 + $0x200] sm:$0xf]
  %v415 = vld [vmem:[%s3 + $0x204] sm:$0xff]
  %v416 = vld [vmem:[%s3 + $0x20c] sm:$0xf]
  %v417 = vld [vmem:[%s3 + $0x210] sm:$0xff]
  %v418 = vld [vmem:[%s3 + $0x218] sm:$0xf]
  %v419 = vld [vmem:[%s3 + $0x21c] sm:$0xff]
  %v420 = vld [vmem:[%s3 + $0x224] sm:$0xf]
  %v421 = vld [vmem:[%s3 + $0x228] sm:$0xff]
  %v422 = vld [vmem:[%s3 + $0x230] sm:$0xf]
  %v423 = vld [vmem:[%s3 + $0x234] sm:$0xff]
  %v424 = vld [vmem:[%s3 + $0x23c] sm:$0xf]
  %v425 = vld [vmem:[%s4] sm:$0x7]
  %v427 = vlaneseq
  %v428 = vshrl.u32 %v427, 7
  %v429 = vsub.s32 0, %v428
  %v430 = vrot.slane %v425, %v429
  %v431 = vlaneseq
  %v432 = vshrl.u32 %v431, 7
  %v433 = vsub.s32 1, %v432
  %v434 = vrot.slane %v425, %v433
  %v435 = vlaneseq
  %v436 = vshrl.u32 %v435, 7
  %v437 = vsub.s32 2, %v436
  %v438 = vrot.slane %v425, %v437
  %v538 = vunpack.c.l.b16 %v329
  %v539 = vunpack.c.h.b16 %v329
  %v540 = vunpack.c.l.b16 %v330
  %v541 = vunpack.c.l.b16 %v331
  %v542 = vunpack.c.h.b16 %v331
  %v543 = vunpack.c.l.b16 %v332
  %v544 = vunpack.c.l.b16 %v333
  %v545 = vunpack.c.h.b16 %v333
  %v546 = vunpack.c.l.b16 %v334
  %v547 = vunpack.c.l.b16 %v335
  %v548 = vunpack.c.h.b16 %v335
  %v549 = vunpack.c.l.b16 %v336
  %v550 = vunpack.c.l.b16 %v337
  %v551 = vunpack.c.h.b16 %v337
  %v552 = vunpack.c.l.b16 %v338
  %v553 = vunpack.c.l.b16 %v339
  %v554 = vunpack.c.h.b16 %v339
  %v555 = vunpack.c.l.b16 %v340
  %v556 = vunpack.c.l.b16 %v341
  %v557 = vunpack.c.h.b16 %v341
  %v558 = vunpack.c.l.b16 %v342
  %v559 = vunpack.c.l.b16 %v343
  %v560 = vunpack.c.h.b16 %v343
  %v561 = vunpack.c.l.b16 %v344
  %v562 = vunpack.c.l.b16 %v345
  %v563 = vunpack.c.h.b16 %v345
  %v564 = vunpack.c.l.b16 %v346
  %v565 = vunpack.c.l.b16 %v347
  %v566 = vunpack.c.h.b16 %v347
  %v567 = vunpack.c.l.b16 %v348
  %v568 = vunpack.c.l.b16 %v349
  %v569 = vunpack.c.h.b16 %v349
  %v570 = vunpack.c.l.b16 %v350
  %v571 = vunpack.c.l.b16 %v351
  %v572 = vunpack.c.h.b16 %v351
  %v573 = vunpack.c.l.b16 %v352
  %v574 = vunpack.c.l.b16 %v353
  %v575 = vunpack.c.h.b16 %v353
  %v576 = vunpack.c.l.b16 %v354
  %v577 = vunpack.c.l.b16 %v355
  %v578 = vunpack.c.h.b16 %v355
  %v579 = vunpack.c.l.b16 %v356
  %v580 = vunpack.c.l.b16 %v357
  %v581 = vunpack.c.h.b16 %v357
  %v582 = vunpack.c.l.b16 %v358
  %v583 = vunpack.c.l.b16 %v359
  %v584 = vunpack.c.h.b16 %v359
  %v585 = vunpack.c.l.b16 %v360
  %v586 = vunpack.c.l.b16 %v361
  %v587 = vunpack.c.h.b16 %v361
  %v588 = vunpack.c.l.b16 %v362
  %v589 = vunpack.c.l.b16 %v363
  %v590 = vunpack.c.h.b16 %v363
  %v591 = vunpack.c.l.b16 %v364
  %v592 = vunpack.c.l.b16 %v365
  %v593 = vunpack.c.h.b16 %v365
  %v594 = vunpack.c.l.b16 %v366
  %v595 = vunpack.c.l.b16 %v367
  %v596 = vunpack.c.h.b16 %v367
  %v597 = vunpack.c.l.b16 %v368
  %v598 = vunpack.c.l.b16 %v369
  %v599 = vunpack.c.h.b16 %v369
  %v600 = vunpack.c.l.b16 %v370
  %v601 = vunpack.c.l.b16 %v371
  %v602 = vunpack.c.h.b16 %v371
  %v603 = vunpack.c.l.b16 %v372
  %v604 = vunpack.c.l.b16 %v373
  %v605 = vunpack.c.h.b16 %v373
  %v606 = vunpack.c.l.b16 %v374
  %v607 = vunpack.c.l.b16 %v375
  %v608 = vunpack.c.h.b16 %v375
  %v609 = vunpack.c.l.b16 %v376
  %v610 = vunpack.c.l.b16 %v377
  %v611 = vunpack.c.h.b16 %v377
  %v612 = vunpack.c.l.b16 %v378
  %v613 = vunpack.c.l.b16 %v379
  %v614 = vunpack.c.h.b16 %v379
  %v615 = vunpack.c.l.b16 %v380
  %v616 = vunpack.c.l.b16 %v381
  %v617 = vunpack.c.h.b16 %v381
  %v618 = vunpack.c.l.b16 %v382
  %v619 = vunpack.c.l.b16 %v383
  %v620 = vunpack.c.h.b16 %v383
  %v621 = vunpack.c.l.b16 %v384
  %v622 = vunpack.c.l.b16 %v385
  %v623 = vunpack.c.h.b16 %v385
  %v624 = vunpack.c.l.b16 %v386
  %v625 = vunpack.c.l.b16 %v387
  %v626 = vunpack.c.h.b16 %v387
  %v627 = vunpack.c.l.b16 %v388
  %v628 = vunpack.c.l.b16 %v389
  %v629 = vunpack.c.h.b16 %v389
  %v630 = vunpack.c.l.b16 %v390
  %v631 = vunpack.c.l.b16 %v391
  %v632 = vunpack.c.h.b16 %v391
  %v633 = vunpack.c.l.b16 %v392
  %v634 = vunpack.c.l.b16 %v393
  %v635 = vunpack.c.h.b16 %v393
  %v636 = vunpack.c.l.b16 %v394
  %v637 = vunpack.c.l.b16 %v395
  %v638 = vunpack.c.h.b16 %v395
  %v639 = vunpack.c.l.b16 %v396
  %v640 = vunpack.c.l.b16 %v397
  %v641 = vunpack.c.h.b16 %v397
  %v642 = vunpack.c.l.b16 %v398
  %v643 = vunpack.c.l.b16 %v399
  %v644 = vunpack.c.h.b16 %v399
  %v645 = vunpack.c.l.b16 %v400
  %v646 = vunpack.c.l.b16 %v401
  %v647 = vunpack.c.h.b16 %v401
  %v648 = vunpack.c.l.b16 %v402
  %v649 = vunpack.c.l.b16 %v403
  %v650 = vunpack.c.h.b16 %v403
  %v651 = vunpack.c.l.b16 %v404
  %v652 = vunpack.c.l.b16 %v405
  %v653 = vunpack.c.h.b16 %v405
  %v654 = vunpack.c.l.b16 %v406
  %v655 = vunpack.c.l.b16 %v407
  %v656 = vunpack.c.h.b16 %v407
  %v657 = vunpack.c.l.b16 %v408
  %v658 = vunpack.c.l.b16 %v409
  %v659 = vunpack.c.h.b16 %v409
  %v660 = vunpack.c.l.b16 %v410
  %v661 = vunpack.c.l.b16 %v411
  %v662 = vunpack.c.h.b16 %v411
  %v663 = vunpack.c.l.b16 %v412
  %v664 = vunpack.c.l.b16 %v413
  %v665 = vunpack.c.h.b16 %v413
  %v666 = vunpack.c.l.b16 %v414
  %v667 = vunpack.c.l.b16 %v415
  %v668 = vunpack.c.h.b16 %v415
  %v669 = vunpack.c.l.b16 %v416
  %v670 = vunpack.c.l.b16 %v417
  %v671 = vunpack.c.h.b16 %v417
  %v672 = vunpack.c.l.b16 %v418
  %v673 = vunpack.c.l.b16 %v419
  %v674 = vunpack.c.h.b16 %v419
  %v675 = vunpack.c.l.b16 %v420
  %v676 = vunpack.c.l.b16 %v421
  %v677 = vunpack.c.h.b16 %v421
  %v678 = vunpack.c.l.b16 %v422
  %v679 = vunpack.c.l.b16 %v423
  %v680 = vunpack.c.h.b16 %v423
  %v681 = vunpack.c.l.b16 %v424
  %v682 = vpack.c.b16 %v541, %v538
  %v683 = vpack.c.b16 %v542, %v539
  %v684 = vpack.c.b16 %v543, %v540
  %v685 = vpack.c.b16 %v547, %v544
  %v686 = vpack.c.b16 %v548, %v545
  %v687 = vpack.c.b16 %v549, %v546
  %v688 = vpack.c.b16 %v553, %v550
  %v689 = vpack.c.b16 %v554, %v551
  %v690 = vpack.c.b16 %v555, %v552
  %v691 = vpack.c.b16 %v559, %v556
  %v692 = vpack.c.b16 %v560, %v557
  %v693 = vpack.c.b16 %v561, %v558
  %v694 = vpack.c.b16 %v565, %v562
  %v695 = vpack.c.b16 %v566, %v563
  %v696 = vpack.c.b16 %v567, %v564
  %v697 = vpack.c.b16 %v571, %v568
  %v698 = vpack.c.b16 %v572, %v569
  %v699 = vpack.c.b16 %v573, %v570
  %v700 = vpack.c.b16 %v577, %v574
  %v701 = vpack.c.b16 %v578, %v575
  %v702 = vpack.c.b16 %v579, %v576
  %v703 = vpack.c.b16 %v583, %v580
  %v704 = vpack.c.b16 %v584, %v581
  %v705 = vpack.c.b16 %v585, %v582
  %v706 = vpack.c.b16 %v589, %v586
  %v707 = vpack.c.b16 %v590, %v587
  %v708 = vpack.c.b16 %v591, %v588
  %v709 = vpack.c.b16 %v595, %v592
  %v710 = vpack.c.b16 %v596, %v593
  %v711 = vpack.c.b16 %v597, %v594
  %v712 = vpack.c.b16 %v601, %v598
  %v713 = vpack.c.b16 %v602, %v599
  %v714 = vpack.c.b16 %v603, %v600
  %v715 = vpack.c.b16 %v607, %v604
  %v716 = vpack.c.b16 %v608, %v605
  %v717 = vpack.c.b16 %v609, %v606
  %v718 = vpack.c.b16 %v613, %v610
  %v719 = vpack.c.b16 %v614, %v611
  %v720 = vpack.c.b16 %v615, %v612
  %v721 = vpack.c.b16 %v619, %v616
  %v722 = vpack.c.b16 %v620, %v617
  %v723 = vpack.c.b16 %v621, %v618
  %v724 = vpack.c.b16 %v625, %v622
  %v725 = vpack.c.b16 %v626, %v623
  %v726 = vpack.c.b16 %v627, %v624
  %v727 = vpack.c.b16 %v631, %v628
  %v728 = vpack.c.b16 %v632, %v629
  %v729 = vpack.c.b16 %v633, %v630
  %v730 = vpack.c.b16 %v637, %v634
  %v731 = vpack.c.b16 %v638, %v635
  %v732 = vpack.c.b16 %v639, %v636
  %v733 = vpack.c.b16 %v643, %v640
  %v734 = vpack.c.b16 %v644, %v641
  %v735 = vpack.c.b16 %v645, %v642
  %v736 = vpack.c.b16 %v649, %v646
  %v737 = vpack.c.b16 %v650, %v647
  %v738 = vpack.c.b16 %v651, %v648
  %v739 = vpack.c.b16 %v655, %v652
  %v740 = vpack.c.b16 %v656, %v653
  %v741 = vpack.c.b16 %v657, %v654
  %v742 = vpack.c.b16 %v661, %v658
  %v743 = vpack.c.b16 %v662, %v659
  %v744 = vpack.c.b16 %v663, %v660
  %v745 = vpack.c.b16 %v667, %v664
  %v746 = vpack.c.b16 %v668, %v665
  %v747 = vpack.c.b16 %v669, %v666
  %v748 = vpack.c.b16 %v673, %v670
  %v749 = vpack.c.b16 %v674, %v671
  %v750 = vpack.c.b16 %v675, %v672
  %v751 = vpack.c.b16 %v679, %v676
  %v752 = vpack.c.b16 %v680, %v677
  %v753 = vpack.c.b16 %v681, %v678
  %826 = vmatprep.subr.bf16.mxu0 %v683
  %827 = vmatpush1.bf16.msra.mxu0 %v682
  %828 = vmatprep.subr.bf16.mxu0 %v686
  %829 = vmatpush1.bf16.msra.mxu0 %v685
  %830 = vmatprep.subr.bf16.mxu0 %v689
  %831 = vmatpush1.bf16.msra.mxu0 %v688
  %832 = vmatprep.subr.bf16.mxu0 %v692
  %833 = vmatpush1.bf16.msra.mxu0 %v691
  %834 = vmatprep.subr.bf16.mxu0 %v695
  %835 = vmatpush1.bf16.msra.mxu0 %v694
  %836 = vmatprep.subr.bf16.mxu0 %v698
  %837 = vmatpush1.bf16.msra.mxu0 %v697
  %838 = vmatprep.subr.bf16.mxu0 %v701
  %839 = vmatpush1.bf16.msra.mxu0 %v700
  %840 = vmatprep.subr.bf16.mxu0 %v704
  %841 = vmatpush1.bf16.msra.mxu0 %v703
  %842 = vmatprep.subr.bf16.mxu0 %v707
  %843 = vmatpush1.bf16.msra.mxu0 %v706
  %844 = vmatprep.subr.bf16.mxu0 %v710
  %845 = vmatpush1.bf16.msra.mxu0 %v709
  %846 = vmatprep.subr.bf16.mxu0 %v713
  %847 = vmatpush1.bf16.msra.mxu0 %v712
  %848 = vmatprep.subr.bf16.mxu0 %v716
  %849 = vmatpush1.bf16.msra.mxu0 %v715
  %850 = vmatprep.subr.bf16.mxu0 %v719
  %851 = vmatpush1.bf16.msra.mxu0 %v718
  %852 = vmatprep.subr.bf16.mxu0 %v722
  %853 = vmatpush1.bf16.msra.mxu0 %v721
  %854 = vmatprep.subr.bf16.mxu0 %v725
  %855 = vmatpush1.bf16.msra.mxu0 %v724
  %856 = vmatprep.subr.bf16.mxu0 %v728
  %857 = vmatpush1.bf16.msra.mxu0 %v727
  %858 = vmatprep.mubr.bf16.mxu0 %v327
  %859 = vmatmul.mubr.bf16.gmra.mrb[0].mxu0 %v326
  %v860 = vpop.f32.mrb[0].mxu0
  %v861 = vadd.f32 %v430, %v860
  %v862 = vpop.f32.mrb[0].mxu0
  %v863 = vadd.f32 %v434, %v862
  %v864 = vpop.f32.mrb[0].mxu0
  %v865 = vadd.f32 %v430, %v864
  %v866 = vpop.f32.mrb[0].mxu0
  %v867 = vadd.f32 %v434, %v866
  %868 = vdwg.mxu0
  %869 = vmatprep.subr.bf16.mxu0 %v731
  %870 = vmatpush1.bf16.msra.mxu0 %v730
  %871 = vmatprep.subr.bf16.mxu0 %v734
  %872 = vmatpush1.bf16.msra.mxu0 %v733
  %873 = vmatprep.subr.bf16.mxu0 %v737
  %874 = vmatpush1.bf16.msra.mxu0 %v736
  %875 = vmatprep.subr.bf16.mxu0 %v740
  %876 = vmatpush1.bf16.msra.mxu0 %v739
  %877 = vmatprep.subr.bf16.mxu0 %v743
  %878 = vmatpush1.bf16.msra.mxu0 %v742
  %879 = vmatprep.subr.bf16.mxu0 %v746
  %880 = vmatpush1.bf16.msra.mxu0 %v745
  %881 = vmatprep.subr.bf16.mxu0 %v749
  %882 = vmatpush1.bf16.msra.mxu0 %v748
  %883 = vmatprep.subr.bf16.mxu0 %v752
  %884 = vmatpush1.bf16.msra.mxu0 %v751
  %885 = vmatprep.subr.bf16.mxu0 0
  %886 = vmatpush1.bf16.msra.mxu0 0
  %887 = vmatprep.subr.bf16.mxu0 0
  %888 = vmatpush1.bf16.msra.mxu0 0
  %889 = vmatprep.subr.bf16.mxu0 0
  %890 = vmatpush1.bf16.msra.mxu0 0
  %891 = vmatprep.subr.bf16.mxu0 0
  %892 = vmatpush1.bf16.msra.mxu0 0
  %893 = vmatprep.subr.bf16.mxu0 0
  %894 = vmatpush1.bf16.msra.mxu0 0
  %895 = vmatprep.subr.bf16.mxu0 0
  %896 = vmatpush1.bf16.msra.mxu0 0
  %897 = vmatprep.subr.bf16.mxu0 0
  %898 = vmatpush1.bf16.msra.mxu0 0
  %899 = vmatprep.subr.bf16.mxu0 0
  %900 = vmatpush1.bf16.msra.mxu0 0
  %901 = vmatprep.mubr.bf16.mxu0 0
  %902 = vmatmul.mubr.bf16.gmra.mrb[0].mxu0 %v328
  %v903 = vpop.f32.mrb[0].mxu0
  %v904 = vadd.f32 %v861, %v903
  %v905 = vpop.f32.mrb[0].mxu0
  %v906 = vadd.f32 %v863, %v905
  %v907 = vpop.f32.mrb[0].mxu0
  %v908 = vadd.f32 %v865, %v907
  %v909 = vpop.f32.mrb[0].mxu0
  %v910 = vadd.f32 %v867, %v909
  %911 = vdwg.mxu0
  %912 = vmatprep.subr.bf16.mxu0 0
  %913 = vmatpush1.bf16.msra.mxu0 %v684
  %914 = vmatprep.subr.bf16.mxu0 0
  %915 = vmatpush1.bf16.msra.mxu0 %v687
  %916 = vmatprep.subr.bf16.mxu0 0
  %917 = vmatpush1.bf16.msra.mxu0 %v690
  %918 = vmatprep.subr.bf16.mxu0 0
  %919 = vmatpush1.bf16.msra.mxu0 %v693
  %920 = vmatprep.subr.bf16.mxu0 0
  %921 = vmatpush1.bf16.msra.mxu0 %v696
  %922 = vmatprep.subr.bf16.mxu0 0
  %923 = vmatpush1.bf16.msra.mxu0 %v699
  %924 = vmatprep.subr.bf16.mxu0 0
  %925 = vmatpush1.bf16.msra.mxu0 %v702
  %926 = vmatprep.subr.bf16.mxu0 0
  %927 = vmatpush1.bf16.msra.mxu0 %v705
  %928 = vmatprep.subr.bf16.mxu0 0
  %929 = vmatpush1.bf16.msra.mxu0 %v708
  %930 = vmatprep.subr.bf16.mxu0 0
  %931 = vmatpush1.bf16.msra.mxu0 %v711
  %932 = vmatprep.subr.bf16.mxu0 0
  %933 = vmatpush1.bf16.msra.mxu0 %v714
  %934 = vmatprep.subr.bf16.mxu0 0
  %935 = vmatpush1.bf16.msra.mxu0 %v717
  %936 = vmatprep.subr.bf16.mxu0 0
  %937 = vmatpush1.bf16.msra.mxu0 %v720
  %938 = vmatprep.subr.bf16.mxu0 0
  %939 = vmatpush1.bf16.msra.mxu0 %v723
  %940 = vmatprep.subr.bf16.mxu0 0
  %941 = vmatpush1.bf16.msra.mxu0 %v726
  %942 = vmatprep.subr.bf16.mxu0 0
  %943 = vmatpush1.bf16.msra.mxu0 %v729
  %944 = vmatprep.mubr.bf16.mxu0 %v327
  %945 = vmatmul.mubr.bf16.gmra.mrb[0].mxu0 %v326
  %v946 = vpop.f32.mrb[0].mxu0
  %v947 = vadd.f32 %v438, %v946
  %v948 = vpop.f32.mrb[0].mxu0
  %v949 = vpop.f32.mrb[0].mxu0
  %v950 = vadd.f32 %v438, %v949
  %v951 = vpop.f32.mrb[0].mxu0
  %952 = vdwg.mxu0
  %953 = vmatprep.subr.bf16.mxu0 0
  %954 = vmatpush1.bf16.msra.mxu0 %v732
  %955 = vmatprep.subr.bf16.mxu0 0
  %956 = vmatpush1.bf16.msra.mxu0 %v735
  %957 = vmatprep.subr.bf16.mxu0 0
  %958 = vmatpush1.bf16.msra.mxu0 %v738
  %959 = vmatprep.subr.bf16.mxu0 0
  %960 = vmatpush1.bf16.msra.mxu0 %v741
  %961 = vmatprep.subr.bf16.mxu0 0
  %962 = vmatpush1.bf16.msra.mxu0 %v744
  %963 = vmatprep.subr.bf16.mxu0 0
  %964 = vmatpush1.bf16.msra.mxu0 %v747
  %965 = vmatprep.subr.bf16.mxu0 0
  %966 = vmatpush1.bf16.msra.mxu0 %v750
  %967 = vmatprep.subr.bf16.mxu0 0
  %968 = vmatpush1.bf16.msra.mxu0 %v753
  %969 = vmatprep.subr.bf16.mxu0 0
  %970 = vmatpush1.bf16.msra.mxu0 0
  %971 = vmatprep.subr.bf16.mxu0 0
  %972 = vmatpush1.bf16.msra.mxu0 0
  %973 = vmatprep.subr.bf16.mxu0 0
  %974 = vmatpush1.bf16.msra.mxu0 0
  %975 = vmatprep.subr.bf16.mxu0 0
  %976 = vmatpush1.bf16.msra.mxu0 0
  %977 = vmatprep.subr.bf16.mxu0 0
  %978 = vmatpush1.bf16.msra.mxu0 0
  %979 = vmatprep.subr.bf16.mxu0 0
  %980 = vmatpush1.bf16.msra.mxu0 0
  %981 = vmatprep.subr.bf16.mxu0 0
  %982 = vmatpush1.bf16.msra.mxu0 0
  %983 = vmatprep.subr.bf16.mxu0 0
  %984 = vmatpush1.bf16.msra.mxu0 0
  %985 = vmatprep.mubr.bf16.mxu0 0
  %986 = vmatmul.mubr.bf16.gmra.mrb[0].mxu0 %v328
  %v987 = vpop.f32.mrb[0].mxu0
  %v988 = vadd.f32 %v947, %v987
  %v989 = vpop.f32.mrb[0].mxu0
  %v990 = vpop.f32.mrb[0].mxu0
  %v991 = vadd.f32 %v950, %v990
  %v992 = vpop.f32.mrb[0].mxu0
  %993 = vdwg.mxu0
  %v994 = vmul.f32 %v904, 0.5
  %v995 = vmul.f32 %v906, 0.5
  %v996 = vmul.f32 %v988, 0.5
  %v997 = vmul.f32 %v908, 0.5
  %v998 = vmul.f32 %v910, 0.5
  %v999 = vmul.f32 %v991, 0.5
  %v1000 = vtanh.pop %v994
  %v1001 = vtanh.pop %v995
  %v1002 = vtanh.pop %v996
  %v1003 = vtanh.pop %v997
  %v1004 = vtanh.pop %v998
  %v1005 = vtanh.pop %v999
  %v1006 = vmul.f32 %v1000, 0.5
  %v1007 = vmul.f32 %v1001, 0.5
  %v1008 = vmul.f32 %v1002, 0.5
  %v1009 = vmul.f32 %v1003, 0.5
  %v1010 = vmul.f32 %v1004, 0.5
  %v1011 = vmul.f32 %v1005, 0.5
  %v1012 = vadd.f32 %v1006, 0.5
  %v1013 = vadd.f32 %v1007, 0.5
  %v1014 = vadd.f32 %v1008, 0.5
  %v1015 = vadd.f32 %v1009, 0.5
  %v1016 = vadd.f32 %v1010, 0.5
  %v1017 = vadd.f32 %v1011, 0.5
  %v1018 = vmul.f32 %v904, %v1012
  %v1019 = vmul.f32 %v906, %v1013
  %v1020 = vmul.f32 %v988, %v1014
  %v1021 = vmul.f32 %v908, %v1015
  %v1022 = vmul.f32 %v910, %v1016
  %v1023 = vmul.f32 %v991, %v1017
  %v1024 = vpack.c.bf16 %v1021, %v1018
  %v1025 = vpack.c.bf16 %v1022, %v1019
  %v1026 = vpack.c.bf16 %v1023, %v1020
  %v1027 = vld [vmem:[%s5] sm:$0xf]
  %v1028 = vld [vmem:[%s5 + $0x4] sm:$0xf]
  %v1029 = vld [vmem:[%s5 + $0x8] sm:$0xf]
  %v1030 = vld [vmem:[%s5 + $0xc] sm:$0xf]
  %v1031 = vld [vmem:[%s5 + $0x10] sm:$0xf]
  %v1032 = vld [vmem:[%s5 + $0x14] sm:$0xf]
  %v1033 = vld [vmem:[%s5 + $0x18] sm:$0xf]
  %v1034 = vld [vmem:[%s5 + $0x1c] sm:$0xf]
  %v1035 = vld [vmem:[%s5 + $0x20] sm:$0xf]
  %v1036 = vld [vmem:[%s5 + $0x24] sm:$0xf]
  %v1037 = vld [vmem:[%s5 + $0x28] sm:$0xf]
  %v1038 = vld [vmem:[%s5 + $0x2c] sm:$0xf]
  %v1039 = vld [vmem:[%s5 + $0x30] sm:$0xf]
  %v1040 = vld [vmem:[%s5 + $0x34] sm:$0xf]
  %v1041 = vld [vmem:[%s5 + $0x38] sm:$0xf]
  %v1042 = vld [vmem:[%s5 + $0x3c] sm:$0xf]
  %v1043 = vld [vmem:[%s5 + $0x40] sm:$0xf]
  %v1044 = vld [vmem:[%s5 + $0x44] sm:$0xf]
  %v1045 = vld [vmem:[%s5 + $0x48] sm:$0xf]
  %v1046 = vld [vmem:[%s5 + $0x4c] sm:$0xf]
  %v1047 = vld [vmem:[%s5 + $0x50] sm:$0xf]
  %v1048 = vld [vmem:[%s5 + $0x54] sm:$0xf]
  %v1049 = vld [vmem:[%s5 + $0x58] sm:$0xf]
  %v1050 = vld [vmem:[%s5 + $0x5c] sm:$0xf]
  %v1051 = vld [vmem:[%s5 + $0x60] sm:$0xf]
  %v1052 = vld [vmem:[%s5 + $0x64] sm:$0xf]
  %v1053 = vld [vmem:[%s5 + $0x68] sm:$0xf]
  %v1054 = vld [vmem:[%s5 + $0x6c] sm:$0xf]
  %v1055 = vld [vmem:[%s5 + $0x70] sm:$0xf]
  %v1056 = vld [vmem:[%s5 + $0x74] sm:$0xf]
  %v1057 = vld [vmem:[%s5 + $0x78] sm:$0xf]
  %v1058 = vld [vmem:[%s5 + $0x7c] sm:$0xf]
  %v1059 = vld [vmem:[%s5 + $0x80] sm:$0xf]
  %v1060 = vld [vmem:[%s5 + $0x84] sm:$0xf]
  %v1061 = vld [vmem:[%s5 + $0x88] sm:$0xf]
  %v1062 = vld [vmem:[%s5 + $0x8c] sm:$0xf]
  %v1063 = vld [vmem:[%s5 + $0x90] sm:$0xf]
  %v1064 = vld [vmem:[%s5 + $0x94] sm:$0xf]
  %v1065 = vld [vmem:[%s5 + $0x98] sm:$0xf]
  %v1066 = vld [vmem:[%s5 + $0x9c] sm:$0xf]
  %v1067 = vld [vmem:[%s5 + $0xa0] sm:$0xf]
  %v1068 = vld [vmem:[%s5 + $0xa4] sm:$0xf]
  %v1069 = vld [vmem:[%s5 + $0xa8] sm:$0xf]
  %v1070 = vld [vmem:[%s5 + $0xac] sm:$0xf]
  %v1071 = vld [vmem:[%s5 + $0xb0] sm:$0xf]
  %v1072 = vld [vmem:[%s5 + $0xb4] sm:$0xf]
  %v1073 = vld [vmem:[%s5 + $0xb8] sm:$0xf]
  %v1074 = vld [vmem:[%s5 + $0xbc] sm:$0xf]
  %v1075 = vld [vmem:[%s6] sm:$0x1]
  %v1077 = vlaneseq
  %v1078 = vshrl.u32 %v1077, 7
  %v1079 = vsub.s32 0, %v1078
  %v1080 = vrot.slane %v1075, %v1079
  %v1130 = vunpack.c.l.b16 %v1027
  %v1131 = vunpack.c.l.b16 %v1028
  %v1132 = vunpack.c.l.b16 %v1029
  %v1133 = vunpack.c.l.b16 %v1030
  %v1134 = vunpack.c.l.b16 %v1031
  %v1135 = vunpack.c.l.b16 %v1032
  %v1136 = vunpack.c.l.b16 %v1033
  %v1137 = vunpack.c.l.b16 %v1034
  %v1138 = vunpack.c.l.b16 %v1035
  %v1139 = vunpack.c.l.b16 %v1036
  %v1140 = vunpack.c.l.b16 %v1037
  %v1141 = vunpack.c.l.b16 %v1038
  %v1142 = vunpack.c.l.b16 %v1039
  %v1143 = vunpack.c.l.b16 %v1040
  %v1144 = vunpack.c.l.b16 %v1041
  %v1145 = vunpack.c.l.b16 %v1042
  %v1146 = vunpack.c.l.b16 %v1043
  %v1147 = vunpack.c.l.b16 %v1044
  %v1148 = vunpack.c.l.b16 %v1045
  %v1149 = vunpack.c.l.b16 %v1046
  %v1150 = vunpack.c.l.b16 %v1047
  %v1151 = vunpack.c.l.b16 %v1048
  %v1152 = vunpack.c.l.b16 %v1049
  %v1153 = vunpack.c.l.b16 %v1050
  %v1154 = vunpack.c.l.b16 %v1051
  %v1155 = vunpack.c.l.b16 %v1052
  %v1156 = vunpack.c.l.b16 %v1053
  %v1157 = vunpack.c.l.b16 %v1054
  %v1158 = vunpack.c.l.b16 %v1055
  %v1159 = vunpack.c.l.b16 %v1056
  %v1160 = vunpack.c.l.b16 %v1057
  %v1161 = vunpack.c.l.b16 %v1058
  %v1162 = vunpack.c.l.b16 %v1059
  %v1163 = vunpack.c.l.b16 %v1060
  %v1164 = vunpack.c.l.b16 %v1061
  %v1165 = vunpack.c.l.b16 %v1062
  %v1166 = vunpack.c.l.b16 %v1063
  %v1167 = vunpack.c.l.b16 %v1064
  %v1168 = vunpack.c.l.b16 %v1065
  %v1169 = vunpack.c.l.b16 %v1066
  %v1170 = vunpack.c.l.b16 %v1067
  %v1171 = vunpack.c.l.b16 %v1068
  %v1172 = vunpack.c.l.b16 %v1069
  %v1173 = vunpack.c.l.b16 %v1070
  %v1174 = vunpack.c.l.b16 %v1071
  %v1175 = vunpack.c.l.b16 %v1072
  %v1176 = vunpack.c.l.b16 %v1073
  %v1177 = vunpack.c.l.b16 %v1074
  %v1178 = vpack.c.b16 %v1131, %v1130
  %v1179 = vpack.c.b16 %v1133, %v1132
  %v1180 = vpack.c.b16 %v1135, %v1134
  %v1181 = vpack.c.b16 %v1137, %v1136
  %v1182 = vpack.c.b16 %v1139, %v1138
  %v1183 = vpack.c.b16 %v1141, %v1140
  %v1184 = vpack.c.b16 %v1143, %v1142
  %v1185 = vpack.c.b16 %v1145, %v1144
  %v1186 = vpack.c.b16 %v1147, %v1146
  %v1187 = vpack.c.b16 %v1149, %v1148
  %v1188 = vpack.c.b16 %v1151, %v1150
  %v1189 = vpack.c.b16 %v1153, %v1152
  %v1190 = vpack.c.b16 %v1155, %v1154
  %v1191 = vpack.c.b16 %v1157, %v1156
  %v1192 = vpack.c.b16 %v1159, %v1158
  %v1193 = vpack.c.b16 %v1161, %v1160
  %v1194 = vpack.c.b16 %v1163, %v1162
  %v1195 = vpack.c.b16 %v1165, %v1164
  %v1196 = vpack.c.b16 %v1167, %v1166
  %v1197 = vpack.c.b16 %v1169, %v1168
  %v1198 = vpack.c.b16 %v1171, %v1170
  %v1199 = vpack.c.b16 %v1173, %v1172
  %v1200 = vpack.c.b16 %v1175, %v1174
  %v1201 = vpack.c.b16 %v1177, %v1176
  %1226 = vmatprep.subr.bf16.mxu0 0
  %1227 = vmatpush1.bf16.msra.mxu0 %v1178
  %1228 = vmatprep.subr.bf16.mxu0 0
  %1229 = vmatpush1.bf16.msra.mxu0 %v1179
  %1230 = vmatprep.subr.bf16.mxu0 0
  %1231 = vmatpush1.bf16.msra.mxu0 %v1180
  %1232 = vmatprep.subr.bf16.mxu0 0
  %1233 = vmatpush1.bf16.msra.mxu0 %v1181
  %1234 = vmatprep.subr.bf16.mxu0 0
  %1235 = vmatpush1.bf16.msra.mxu0 %v1182
  %1236 = vmatprep.subr.bf16.mxu0 0
  %1237 = vmatpush1.bf16.msra.mxu0 %v1183
  %1238 = vmatprep.subr.bf16.mxu0 0
  %1239 = vmatpush1.bf16.msra.mxu0 %v1184
  %1240 = vmatprep.subr.bf16.mxu0 0
  %1241 = vmatpush1.bf16.msra.mxu0 %v1185
  %1242 = vmatprep.subr.bf16.mxu0 0
  %1243 = vmatpush1.bf16.msra.mxu0 %v1186
  %1244 = vmatprep.subr.bf16.mxu0 0
  %1245 = vmatpush1.bf16.msra.mxu0 %v1187
  %1246 = vmatprep.subr.bf16.mxu0 0
  %1247 = vmatpush1.bf16.msra.mxu0 %v1188
  %1248 = vmatprep.subr.bf16.mxu0 0
  %1249 = vmatpush1.bf16.msra.mxu0 %v1189
  %1250 = vmatprep.subr.bf16.mxu0 0
  %1251 = vmatpush1.bf16.msra.mxu0 %v1190
  %1252 = vmatprep.subr.bf16.mxu0 0
  %1253 = vmatpush1.bf16.msra.mxu0 %v1191
  %1254 = vmatprep.subr.bf16.mxu0 0
  %1255 = vmatpush1.bf16.msra.mxu0 %v1192
  %1256 = vmatprep.subr.bf16.mxu0 0
  %1257 = vmatpush1.bf16.msra.mxu0 %v1193
  %1258 = vmatprep.mubr.bf16.mxu0 %v1025
  %1259 = vmatmul.mubr.bf16.gmra.mrb[0].mxu0 %v1024
  %v1260 = vpop.f32.mrb[0].mxu0
  %v1261 = vadd.f32 %v1080, %v1260
  %v1262 = vpop.f32.mrb[0].mxu0
  %v1263 = vpop.f32.mrb[0].mxu0
  %v1264 = vadd.f32 %v1080, %v1263
  %v1265 = vpop.f32.mrb[0].mxu0
  %1266 = vdwg.mxu0
  %1267 = vmatprep.subr.bf16.mxu0 0
  %1268 = vmatpush1.bf16.msra.mxu0 %v1194
  %1269 = vmatprep.subr.bf16.mxu0 0
  %1270 = vmatpush1.bf16.msra.mxu0 %v1195
  %1271 = vmatprep.subr.bf16.mxu0 0
  %1272 = vmatpush1.bf16.msra.mxu0 %v1196
  %1273 = vmatprep.subr.bf16.mxu0 0
  %1274 = vmatpush1.bf16.msra.mxu0 %v1197
  %1275 = vmatprep.subr.bf16.mxu0 0
  %1276 = vmatpush1.bf16.msra.mxu0 %v1198
  %1277 = vmatprep.subr.bf16.mxu0 0
  %1278 = vmatpush1.bf16.msra.mxu0 %v1199
  %1279 = vmatprep.subr.bf16.mxu0 0
  %1280 = vmatpush1.bf16.msra.mxu0 %v1200
  %1281 = vmatprep.subr.bf16.mxu0 0
  %1282 = vmatpush1.bf16.msra.mxu0 %v1201
  %1283 = vmatprep.subr.bf16.mxu0 0
  %1284 = vmatpush1.bf16.msra.mxu0 0
  %1285 = vmatprep.subr.bf16.mxu0 0
  %1286 = vmatpush1.bf16.msra.mxu0 0
  %1287 = vmatprep.subr.bf16.mxu0 0
  %1288 = vmatpush1.bf16.msra.mxu0 0
  %1289 = vmatprep.subr.bf16.mxu0 0
  %1290 = vmatpush1.bf16.msra.mxu0 0
  %1291 = vmatprep.subr.bf16.mxu0 0
  %1292 = vmatpush1.bf16.msra.mxu0 0
  %1293 = vmatprep.subr.bf16.mxu0 0
  %1294 = vmatpush1.bf16.msra.mxu0 0
  %1295 = vmatprep.subr.bf16.mxu0 0
  %1296 = vmatpush1.bf16.msra.mxu0 0
  %1297 = vmatprep.subr.bf16.mxu0 0
  %1298 = vmatpush1.bf16.msra.mxu0 0
  %1299 = vmatprep.mubr.bf16.mxu0 0
  %1300 = vmatmul.mubr.bf16.gmra.mrb[0].mxu0 %v1026
  %v1301 = vpop.f32.mrb[0].mxu0
  %v1302 = vadd.f32 %v1261, %v1301
  %v1303 = vpop.f32.mrb[0].mxu0
  %v1304 = vpop.f32.mrb[0].mxu0
  %v1305 = vadd.f32 %v1264, %v1304
  %v1306 = vpop.f32.mrb[0].mxu0
  %1307 = vdwg.mxu0
  %vm1308 = vcmask 130048
  %1309 = vst.msk [vmem:[%s7] sm:$0xff] %vm1308, %v1302
  %1310 = vst.msk [vmem:[%s7 + $0x8] sm:$0xff] %vm1308, %v1305
  // Predicated region
  $region30: #{gnpoolswish_forward.3} parent=0 // pred_check
    _
  $region31: #{gnpoolswish_forward.3} parent=0 // pred_check_branch
    %1312 = sbr.rel (0) target = $region33
  $region32: #{gnpoolswish_forward.3} parent=0 // pred_region
    _
  $region33: #{gnpoolswish_forward.3} parent=0 // pred_fallthru
    _
  // Predicated region
  $region34: #{gnpoolswish_forward.3} parent=0 // pred_check
    _
  $region35: #{gnpoolswish_forward.3} parent=0 // pred_check_branch
    %1314 = sbr.rel (0) target = $region37
  $region36: #{gnpoolswish_forward.3} parent=0 // pred_region
    _
  $region37: #{gnpoolswish_forward.3} parent=0 // pred_fallthru
    _

// kernel: gnpoolswish_forward.2
$region0: #{gnpoolswish_forward.2}
  #allocation0 [shape = 'u32[]', space=smem, size = 0x4, offset = 0x4, fixed_abs, tag = 'smem constant byte address 0x4 - core index']
  #allocation1 [shape = 'u32[144,128]{1,0:T(1,128)}', space=vmem, size = 0x12000, scoped, tag = 'internal scratch']
  %s0 = inlined_call_operand.vmem [shape: bf16[16,128], index: 0, kind: input, shape index: {}]
  %s1 = inlined_call_operand.vmem [shape: bf16[128,384], index: 1, kind: input, shape index: {}]
  %s2 = inlined_call_operand.vmem [shape: f32[1,384], index: 2, kind: input, shape index: {}]
  %s3 = inlined_call_operand.hbm [shape: bf16[384,384], index: 3, kind: input, shape index: {}]
  %s4 = inlined_call_operand.vmem [shape: f32[1,384], index: 4, kind: input, shape index: {}]
  %s5 = inlined_call_operand.vmem [shape: bf16[384,8], index: 5, kind: input, shape index: {}]
  %s6 = inlined_call_operand.vmem [shape: f32[1,8], index: 6, kind: input, shape index: {}]
  %s7 = inlined_call_operand.vmem [shape: f32[16,8], index: 7, kind: output, shape index: {}]
  %s8 = sld [smem:[#allocation0]]
  $region42: #{gnpoolswish_forward.2} parent=0
    _
  %s10 = ssub.s32 1, %s8
  %s11 = scalar_select 0, %s10, %s8
  $region1: #{gnpoolswish_forward.2} parent=0
    #allocation2 [shape = 'u8[294912]{0}', space=vmem, size = 0x48000, scoped, tag = 'input window, operand 3, single buffered']
    #allocation3 [shape = 's32[1]{0}', space=sflag, size = 0x4, scoped, tag = 'scoped memory for gnpoolswish_forward.2']
    %12 = vsyncpa [#allocation3], 0
    // Predicated region
    $region2: #{gnpoolswish_forward.2} parent=1 // pred_check
      _
    $region3: #{gnpoolswish_forward.2} parent=1 // pred_check_branch
      %14 = sbr.rel (0) target = $region5
    $region4: #{gnpoolswish_forward.2} parent=1 // pred_region
      _
    $region5: #{gnpoolswish_forward.2} parent=1 // pred_fallthru
      _
    // Predicated region
    $region6: #{gnpoolswish_forward.2} parent=1 // pred_check
      _
    $region7: #{gnpoolswish_forward.2} parent=1 // pred_check_branch
      %16 = sbr.rel (0) target = $region9
    $region8: #{gnpoolswish_forward.2} parent=1 // pred_region
      _
    $region9: #{gnpoolswish_forward.2} parent=1 // pred_fallthru
      _
    // Predicated region
    $region10: #{gnpoolswish_forward.2} parent=1 // pred_check
      _
    $region11: #{gnpoolswish_forward.2} parent=1 // pred_check_branch
      %18 = sbr.rel (0) target = $region13
    $region12: #{gnpoolswish_forward.2} parent=1 // pred_region
      _
    $region13: #{gnpoolswish_forward.2} parent=1 // pred_fallthru
      _
    // Predicated region
    $region14: #{gnpoolswish_forward.2} parent=1 // pred_check
      _
    $region15: #{gnpoolswish_forward.2} parent=1 // pred_check_branch
      %20 = sbr.rel (0) target = $region17
    $region16: #{gnpoolswish_forward.2} parent=1 // pred_region
      %s22 = ssub.s32 9216, 9216
      %23 = vsyncadd [#allocation3], %s22
      %s24 = sshll.u32 [#allocation2], 4
      %s25 = int_to_ptr.vmem [resolvable:$true] %s24
      %30 = dma.hbm_to_vmem [thread:$0]  %s3, 9216, %s25, [#allocation3], 192, 192, 12
    $region17: #{gnpoolswish_forward.2} parent=1 // pred_fallthru
      _
    // Predicated region
    $region18: #{gnpoolswish_forward.2} parent=1 // pred_check
      _
    $region19: #{gnpoolswish_forward.2} parent=1 // pred_check_branch
      %32 = sbr.rel (0) target = $region21
    $region20: #{gnpoolswish_forward.2} parent=1 // pred_region
      _
    $region21: #{gnpoolswish_forward.2} parent=1 // pred_fallthru
      _
    // Predicated region
    $region22: #{gnpoolswish_forward.2} parent=1 // pred_check
      _
    $region23: #{gnpoolswish_forward.2} parent=1 // pred_check_branch
      %34 = sbr.rel (0) target = $region25
    $region24: #{gnpoolswish_forward.2} parent=1 // pred_region
      _
    $region25: #{gnpoolswish_forward.2} parent=1 // pred_fallthru
      _
    // Predicated region
    $region26: #{gnpoolswish_forward.2} parent=1 // pred_check
      _
    $region27: #{gnpoolswish_forward.2} parent=1 // pred_check_branch
      %36 = sbr.rel (0) target = $region29
    $region28: #{gnpoolswish_forward.2} parent=1 // pred_region
      _
    $region29: #{gnpoolswish_forward.2} parent=1 // pred_fallthru
      _
    // Predicated region
    $region30: #{gnpoolswish_forward.2} parent=1 // pred_check
      _
    $region31: #{gnpoolswish_forward.2} parent=1 // pred_check_branch
      %38 = sbr.rel (0) target = $region33
    $region32: #{gnpoolswish_forward.2} parent=1 // pred_region
      %39 = dma.done [#allocation3], 9216
    $region33: #{gnpoolswish_forward.2} parent=1 // pred_fallthru
      _
    %v41 = vld [vmem:[%s0] sm:$0xf]
    %v42 = vld [vmem:[%s0 + $0x4] sm:$0xf]
    %v43 = vld [vmem:[%s1] sm:$0xff]
    %v44 = vld [vmem:[%s1 + $0x8] sm:$0xf]
    %v45 = vld [vmem:[%s1 + $0xc] sm:$0xff]
    %v46 = vld [vmem:[%s1 + $0x14] sm:$0xf]
    %v47 = vld [vmem:[%s1 + $0x18] sm:$0xff]
    %v48 = vld [vmem:[%s1 + $0x20] sm:$0xf]
    %v49 = vld [vmem:[%s1 + $0x24] sm:$0xff]
    %v50 = vld [vmem:[%s1 + $0x2c] sm:$0xf]
    %v51 = vld [vmem:[%s1 + $0x30] sm:$0xff]
    %v52 = vld [vmem:[%s1 + $0x38] sm:$0xf]
    %v53 = vld [vmem:[%s1 + $0x3c] sm:$0xff]
    %v54 = vld [vmem:[%s1 + $0x44] sm:$0xf]
    %v55 = vld [vmem:[%s1 + $0x48] sm:$0xff]
    %v56 = vld [vmem:[%s1 + $0x50] sm:$0xf]
    %v57 = vld [vmem:[%s1 + $0x54] sm:$0xff]
    %v58 = vld [vmem:[%s1 + $0x5c] sm:$0xf]
    %v59 = vld [vmem:[%s1 + $0x60] sm:$0xff]
    %v60 = vld [vmem:[%s1 + $0x68] sm:$0xf]
    %v61 = vld [vmem:[%s1 + $0x6c] sm:$0xff]
    %v62 = vld [vmem:[%s1 + $0x74] sm:$0xf]
    %v63 = vld [vmem:[%s1 + $0x78] sm:$0xff]
    %v64 = vld [vmem:[%s1 + $0x80] sm:$0xf]
    %v65 = vld [vmem:[%s1 + $0x84] sm:$0xff]
    %v66 = vld [vmem:[%s1 + $0x8c] sm:$0xf]
    %v67 = vld [vmem:[%s1 + $0x90] sm:$0xff]
    %v68 = vld [vmem:[%s1 + $0x98] sm:$0xf]
    %v69 = vld [vmem:[%s1 + $0x9c] sm:$0xff]
    %v70 = vld [vmem:[%s1 + $0xa4] sm:$0xf]
    %v71 = vld [vmem:[%s1 + $0xa8] sm:$0xff]
    %v72 = vld [vmem:[%s1 + $0xb0] sm:$0xf]
    %v73 = vld [vmem:[%s1 + $0xb4] sm:$0xff]
    %v74 = vld [vmem:[%s1 + $0xbc] sm:$0xf]
    %v75 = vld [vmem:[%s2] sm:$0x7]
    %v77 = vlaneseq
    %v78 = vshrl.u32 %v77, 7
    %v79 = vsub.s32 0, %v78
    %v80 = vrot.slane %v75, %v79
    %v81 = vlaneseq
    %v82 = vshrl.u32 %v81, 7
    %v83 = vsub.s32 1, %v82
    %v84 = vrot.slane %v75, %v83
    %v85 = vlaneseq
    %v86 = vshrl.u32 %v85, 7
    %v87 = vsub.s32 2, %v86
    %v88 = vrot.slane %v75, %v87
    %v94 = vunpack.c.l.b16 %v41
    %v95 = vunpack.c.l.b16 %v42
    %v96 = vpack.c.b16 %v95, %v94
    %v130 = vunpack.c.l.b16 %v43
    %v131 = vunpack.c.h.b16 %v43
    %v132 = vunpack.c.l.b16 %v44
    %v133 = vunpack.c.l.b16 %v45
    %v134 = vunpack.c.h.b16 %v45
    %v135 = vunpack.c.l.b16 %v46
    %v136 = vunpack.c.l.b16 %v47
    %v137 = vunpack.c.h.b16 %v47
    %v138 = vunpack.c.l.b16 %v48
    %v139 = vunpack.c.l.b16 %v49
    %v140 = vunpack.c.h.b16 %v49
    %v141 = vunpack.c.l.b16 %v50
    %v142 = vunpack.c.l.b16 %v51
    %v143 = vunpack.c.h.b16 %v51
    %v144 = vunpack.c.l.b16 %v52
    %v145 = vunpack.c.l.b16 %v53
    %v146 = vunpack.c.h.b16 %v53
    %v147 = vunpack.c.l.b16 %v54
    %v148 = vunpack.c.l.b16 %v55
    %v149 = vunpack.c.h.b16 %v55
    %v150 = vunpack.c.l.b16 %v56
    %v151 = vunpack.c.l.b16 %v57
    %v152 = vunpack.c.h.b16 %v57
    %v153 = vunpack.c.l.b16 %v58
    %v154 = vunpack.c.l.b16 %v59
    %v155 = vunpack.c.h.b16 %v59
    %v156 = vunpack.c.l.b16 %v60
    %v157 = vunpack.c.l.b16 %v61
    %v158 = vunpack.c.h.b16 %v61
    %v159 = vunpack.c.l.b16 %v62
    %v160 = vunpack.c.l.b16 %v63
    %v161 = vunpack.c.h.b16 %v63
    %v162 = vunpack.c.l.b16 %v64
    %v163 = vunpack.c.l.b16 %v65
    %v164 = vunpack.c.h.b16 %v65
    %v165 = vunpack.c.l.b16 %v66
    %v166 = vunpack.c.l.b16 %v67
    %v167 = vunpack.c.h.b16 %v67
    %v168 = vunpack.c.l.b16 %v68
    %v169 = vunpack.c.l.b16 %v69
    %v170 = vunpack.c.h.b16 %v69
    %v171 = vunpack.c.l.b16 %v70
    %v172 = vunpack.c.l.b16 %v71
    %v173 = vunpack.c.h.b16 %v71
    %v174 = vunpack.c.l.b16 %v72
    %v175 = vunpack.c.l.b16 %v73
    %v176 = vunpack.c.h.b16 %v73
    %v177 = vunpack.c.l.b16 %v74
    %v178 = vpack.c.b16 %v133, %v130
    %v179 = vpack.c.b16 %v134, %v131
    %v180 = vpack.c.b16 %v135, %v132
    %v181 = vpack.c.b16 %v139, %v136
    %v182 = vpack.c.b16 %v140, %v137
    %v183 = vpack.c.b16 %v141, %v138
    %v184 = vpack.c.b16 %v145, %v142
    %v185 = vpack.c.b16 %v146, %v143
    %v186 = vpack.c.b16 %v147, %v144
    %v187 = vpack.c.b16 %v151, %v148
    %v188 = vpack.c.b16 %v152, %v149
    %v189 = vpack.c.b16 %v153, %v150
    %v190 = vpack.c.b16 %v157, %v154
    %v191 = vpack.c.b16 %v158, %v155
    %v192 = vpack.c.b16 %v159, %v156
    %v193 = vpack.c.b16 %v163, %v160
    %v194 = vpack.c.b16 %v164, %v161
    %v195 = vpack.c.b16 %v165, %v162
    %v196 = vpack.c.b16 %v169, %v166
    %v197 = vpack.c.b16 %v170, %v167
    %v198 = vpack.c.b16 %v171, %v168
    %v199 = vpack.c.b16 %v175, %v172
    %v200 = vpack.c.b16 %v176, %v173
    %v201 = vpack.c.b16 %v177, %v174
    %226 = vmatprep.subr.bf16.mxu0 %v179
    %227 = vmatpush1.bf16.msra.mxu0 %v178
    %228 = vmatprep.subr.bf16.mxu0 %v182
    %229 = vmatpush1.bf16.msra.mxu0 %v181
    %230 = vmatprep.subr.bf16.mxu0 %v185
    %231 = vmatpush1.bf16.msra.mxu0 %v184
    %232 = vmatprep.subr.bf16.mxu0 %v188
    %233 = vmatpush1.bf16.msra.mxu0 %v187
    %234 = vmatprep.subr.bf16.mxu0 %v191
    %235 = vmatpush1.bf16.msra.mxu0 %v190
    %236 = vmatprep.subr.bf16.mxu0 %v194
    %237 = vmatpush1.bf16.msra.mxu0 %v193
    %238 = vmatprep.subr.bf16.mxu0 %v197
    %239 = vmatpush1.bf16.msra.mxu0 %v196
    %240 = vmatprep.subr.bf16.mxu0 %v200
    %241 = vmatpush1.bf16.msra.mxu0 %v199
    %242 = vmatprep.subr.bf16.mxu0 0
    %243 = vmatpush1.bf16.msra.mxu0 0
    %244 = vmatprep.subr.bf16.mxu0 0
    %245 = vmatpush1.bf16.msra.mxu0 0
    %246 = vmatprep.subr.bf16.mxu0 0
    %247 = vmatpush1.bf16.msra.mxu0 0
    %248 = vmatprep.subr.bf16.mxu0 0
    %249 = vmatpush1.bf16.msra.mxu0 0
    %250 = vmatprep.subr.bf16.mxu0 0
    %251 = vmatpush1.bf16.msra.mxu0 0
    %252 = vmatprep.subr.bf16.mxu0 0
    %253 = vmatpush1.bf16.msra.mxu0 0
    %254 = vmatprep.subr.bf16.mxu0 0
    %255 = vmatpush1.bf16.msra.mxu0 0
    %256 = vmatprep.subr.bf16.mxu0 0
    %257 = vmatpush1.bf16.msra.mxu0 0
    %258 = vmatprep.mubr.bf16.mxu0 0
    %259 = vmatmul.mubr.bf16.gmra.mrb[0].mxu0 %v96
    %v260 = vpop.f32.mrb[0].mxu0
    %v261 = vadd.f32 %v80, %v260
    %v262 = vpop.f32.mrb[0].mxu0
    %v263 = vadd.f32 %v84, %v262
    %v264 = vpop.f32.mrb[0].mxu0
    %v265 = vadd.f32 %v80, %v264
    %v266 = vpop.f32.mrb[0].mxu0
    %v267 = vadd.f32 %v84, %v266
    %268 = vdwg.mxu0
    %269 = vmatprep.subr.bf16.mxu0 0
    %270 = vmatpush1.bf16.msra.mxu0 %v180
    %271 = vmatprep.subr.bf16.mxu0 0
    %272 = vmatpush1.bf16.msra.mxu0 %v183
    %273 = vmatprep.subr.bf16.mxu0 0
    %274 = vmatpush1.bf16.msra.mxu0 %v186
    %275 = vmatprep.subr.bf16.mxu0 0
    %276 = vmatpush1.bf16.msra.mxu0 %v189
    %277 = vmatprep.subr.bf16.mxu0 0
    %278 = vmatpush1.bf16.msra.mxu0 %v192
    %279 = vmatprep.subr.bf16.mxu0 0
    %280 = vmatpush1.bf16.msra.mxu0 %v195
    %281 = vmatprep.subr.bf16.mxu0 0
    %282 = vmatpush1.bf16.msra.mxu0 %v198
    %283 = vmatprep.subr.bf16.mxu0 0
    %284 = vmatpush1.bf16.msra.mxu0 %v201
    %285 = vmatprep.subr.bf16.mxu0 0
    %286 = vmatpush1.bf16.msra.mxu0 0
    %287 = vmatprep.subr.bf16.mxu0 0
    %288 = vmatpush1.bf16.msra.mxu0 0
    %289 = vmatprep.subr.bf16.mxu0 0
    %290 = vmatpush1.bf16.msra.mxu0 0
    %291 = vmatprep.subr.bf16.mxu0 0
    %292 = vmatpush1.bf16.msra.mxu0 0
    %293 = vmatprep.subr.bf16.mxu0 0
    %294 = vmatpush1.bf16.msra.mxu0 0
    %295 = vmatprep.subr.bf16.mxu0 0
    %296 = vmatpush1.bf16.msra.mxu0 0
    %297 = vmatprep.subr.bf16.mxu0 0
    %298 = vmatpush1.bf16.msra.mxu0 0
    %299 = vmatprep.subr.bf16.mxu0 0
    %300 = vmatpush1.bf16.msra.mxu0 0
    %301 = vmatprep.mubr.bf16.mxu0 0
    %302 = vmatmul.mubr.bf16.gmra.mrb[0].mxu0 %v96
    %v303 = vpop.f32.mrb[0].mxu0
    %v304 = vadd.f32 %v88, %v303
    %v305 = vpop.f32.mrb[0].mxu0
    %v306 = vpop.f32.mrb[0].mxu0
    %v307 = vadd.f32 %v88, %v306
    %v308 = vpop.f32.mrb[0].mxu0
    %309 = vdwg.mxu0
    %v310 = vmul.f32 %v261, 0.5
    %v311 = vmul.f32 %v263, 0.5
    %v312 = vmul.f32 %v304, 0.5
    %v313 = vmul.f32 %v265, 0.5
    %v314 = vmul.f32 %v267, 0.5
    %v315 = vmul.f32 %v307, 0.5
    %v316 = vtanh.pop %v310
    %v317 = vtanh.pop %v311
    %v318 = vtanh.pop %v312
    %v319 = vtanh.pop %v313
    %v320 = vtanh.pop %v314
    %v321 = vtanh.pop %v315
    %v322 = vmul.f32 %v316, 0.5
    %v323 = vmul.f32 %v317, 0.5
    %v324 = vmul.f32 %v318, 0.5
    %v325 = vmul.f32 %v319, 0.5
    %v326 = vmul.f32 %v320, 0.5
    %v327 = vmul.f32 %v321, 0.5
    %v328 = vadd.f32 %v322, 0.5
    %v329 = vadd.f32 %v323, 0.5
    %v330 = vadd.f32 %v324, 0.5
    %v331 = vadd.f32 %v325, 0.5
    %v332 = vadd.f32 %v326, 0.5
    %v333 = vadd.f32 %v327, 0.5
    %v334 = vmul.f32 %v261, %v328
    %v335 = vmul.f32 %v263, %v329
    %v336 = vmul.f32 %v304, %v330
    %v337 = vmul.f32 %v265, %v331
    %v338 = vmul.f32 %v267, %v332
    %v339 = vmul.f32 %v307, %v333
    %v340 = vpack.c.bf16 %v337, %v334
    %v341 = vpack.c.bf16 %v338, %v335
    %v342 = vpack.c.bf16 %v339, %v336
    %v343 = vld [vmem:[#allocation2] sm:$0xff]
    %v344 = vld [vmem:[#allocation2 + $0x8] sm:$0xf]
    %v345 = vld [vmem:[#allocation2 + $0xc] sm:$0xff]
    %v346 = vld [vmem:[#allocation2 + $0x14] sm:$0xf]
    %v347 = vld [vmem:[#allocation2 + $0x18] sm:$0xff]
    %v348 = vld [vmem:[#allocation2 + $0x20] sm:$0xf]
    %v349 = vld [vmem:[#allocation2 + $0x24] sm:$0xff]
    %v350 = vld [vmem:[#allocation2 + $0x2c] sm:$0xf]
    %v351 = vld [vmem:[#allocation2 + $0x30] sm:$0xff]
    %v352 = vld [vmem:[#allocation2 + $0x38] sm:$0xf]
    %v353 = vld [vmem:[#allocation2 + $0x3c] sm:$0xff]
    %v354 = vld [vmem:[#allocation2 + $0x44] sm:$0xf]
    %v355 = vld [vmem:[#allocation2 + $0x48] sm:$0xff]
    %v356 = vld [vmem:[#allocation2 + $0x50] sm:$0xf]
    %v357 = vld [vmem:[#allocation2 + $0x54] sm:$0xff]
    %v358 = vld [vmem:[#allocation2 + $0x5c] sm:$0xf]
    %v359 = vld [vmem:[#allocation2 + $0x60] sm:$0xff]
    %v360 = vld [vmem:[#allocation2 + $0x68] sm:$0xf]
    %v361 = vld [vmem:[#allocation2 + $0x6c] sm:$0xff]
    %v362 = vld [vmem:[#allocation2 + $0x74] sm:$0xf]
    %v363 = vld [vmem:[#allocation2 + $0x78] sm:$0xff]
    %v364 = vld [vmem:[#allocation2 + $0x80] sm:$0xf]
    %v365 = vld [vmem:[#allocation2 + $0x84] sm:$0xff]
    %v366 = vld [vmem:[#allocation2 + $0x8c] sm:$0xf]
    %v367 = vld [vmem:[#allocation2 + $0x90] sm:$0xff]
    %v368 = vld [vmem:[#allocation2 + $0x98] sm:$0xf]
    %v369 = vld [vmem:[#allocation2 + $0x9c] sm:$0xff]
    %v370 = vld [vmem:[#allocation2 + $0xa4] sm:$0xf]
    %v371 = vld [vmem:[#allocation2 + $0xa8] sm:$0xff]
    %v372 = vld [vmem:[#allocation2 + $0xb0] sm:$0xf]
    %v373 = vld [vmem:[#allocation2 + $0xb4] sm:$0xff]
    %v374 = vld [vmem:[#allocation2 + $0xbc] sm:$0xf]
    %v375 = vld [vmem:[#allocation2 + $0xc0] sm:$0xff]
    %v376 = vld [vmem:[#allocation2 + $0xc8] sm:$0xf]
    %v377 = vld [vmem:[#allocation2 + $0xcc] sm:$0xff]
    %v378 = vld [vmem:[#allocation2 + $0xd4] sm:$0xf]
    %v379 = vld [vmem:[#allocation2 + $0xd8] sm:$0xff]
    %v380 = vld [vmem:[#allocation2 + $0xe0] sm:$0xf]
    %v381 = vld [vmem:[#allocation2 + $0xe4] sm:$0xff]
    %v382 = vld [vmem:[#allocation2 + $0xec] sm:$0xf]
    %v383 = vld [vmem:[#allocation2 + $0xf0] sm:$0xff]
    %v384 = vld [vmem:[#allocation2 + $0xf8] sm:$0xf]
    %v385 = vld [vmem:[#allocation2 + $0xfc] sm:$0xff]
    %v386 = vld [vmem:[#allocation2 + $0x104] sm:$0xf]
    %v387 = vld [vmem:[#allocation2 + $0x108] sm:$0xff]
    %v388 = vld [vmem:[#allocation2 + $0x110] sm:$0xf]
    %v389 = vld [vmem:[#allocation2 + $0x114] sm:$0xff]
    %v390 = vld [vmem:[#allocation2 + $0x11c] sm:$0xf]
    %v391 = vld [vmem:[#allocation2 + $0x120] sm:$0xff]
    %v392 = vld [vmem:[#allocation2 + $0x128] sm:$0xf]
    %v393 = vld [vmem:[#allocation2 + $0x12c] sm:$0xff]
    %v394 = vld [vmem:[#allocation2 + $0x134] sm:$0xf]
    %v395 = vld [vmem:[#allocation2 + $0x138] sm:$0xff]
    %v396 = vld [vmem:[#allocation2 + $0x140] sm:$0xf]
    %v397 = vld [vmem:[#allocation2 + $0x144] sm:$0xff]
    %v398 = vld [vmem:[#allocation2 + $0x14c] sm:$0xf]
    %v399 = vld [vmem:[#allocation2 + $0x150] sm:$0xff]
    %v400 = vld [vmem:[#allocation2 + $0x158] sm:$0xf]
    %v401 = vld [vmem:[#allocation2 + $0x15c] sm:$0xff]
    %v402 = vld [vmem:[#allocation2 + $0x164] sm:$0xf]
    %v403 = vld [vmem:[#allocation2 + $0x168] sm:$0xff]
    %v404 = vld [vmem:[#allocation2 + $0x170] sm:$0xf]
    %v405 = vld [vmem:[#allocation2 + $0x174] sm:$0xff]
    %v406 = vld [vmem:[#allocation2 + $0x17c] sm:$0xf]
    %v407 = vld [vmem:[#allocation2 + $0x180] sm:$0xff]
    %v408 = vld [vmem:[#allocation2 + $0x188] sm:$0xf]
    %v409 = vld [vmem:[#allocation2 + $0x18c] sm:$0xff]
    %v410 = vld [vmem:[#allocation2 + $0x194] sm:$0xf]
    %v411 = vld [vmem:[#allocation2 + $0x198] sm:$0xff]
    %v412 = vld [vmem:[#allocation2 + $0x1a0] sm:$0xf]
    %v413 = vld [vmem:[#allocation2 + $0x1a4] sm:$0xff]
    %v414 = vld [vmem:[#allocation2 + $0x1ac] sm:$0xf]
    %v415 = vld [vmem:[#allocation2 + $0x1b0] sm:$0xff]
    %v416 = vld [vmem:[#allocation2 + $0x1b8] sm:$0xf]
    %v417 = vld [vmem:[#allocation2 + $0x1bc] sm:$0xff]
    %v418 = vld [vmem:[#allocation2 + $0x1c4] sm:$0xf]
    %v419 = vld [vmem:[#allocation2 + $0x1c8] sm:$0xff]
    %v420 = vld [vmem:[#allocation2 + $0x1d0] sm:$0xf]
    %v421 = vld [vmem:[#allocation2 + $0x1d4] sm:$0xff]
    %v422 = vld [vmem:[#allocation2 + $0x1dc] sm:$0xf]
    %v423 = vld [vmem:[#allocation2 + $0x1e0] sm:$0xff]
    %v424 = vld [vmem:[#allocation2 + $0x1e8] sm:$0xf]
    %v425 = vld [vmem:[#allocation2 + $0x1ec] sm:$0xff]
    %v426 = vld [vmem:[#allocation2 + $0x1f4] sm:$0xf]
    %v427 = vld [vmem:[#allocation2 + $0x1f8] sm:$0xff]
    %v428 = vld [vmem:[#allocation2 + $0x200] sm:$0xf]
    %v429 = vld [vmem:[#allocation2 + $0x204] sm:$0xff]
    %v430 = vld [vmem:[#allocation2 + $0x20c] sm:$0xf]
    %v431 = vld [vmem:[#allocation2 + $0x210] sm:$0xff]
    %v432 = vld [vmem:[#allocation2 + $0x218] sm:$0xf]
    %v433 = vld [vmem:[#allocation2 + $0x21c] sm:$0xff]
    %v434 = vld [vmem:[#allocation2 + $0x224] sm:$0xf]
    %v435 = vld [vmem:[#allocation2 + $0x228] sm:$0xff]
    %v436 = vld [vmem:[#allocation2 + $0x230] sm:$0xf]
    %v437 = vld [vmem:[#allocation2 + $0x234] sm:$0xff]
    %v438 = vld [vmem:[#allocation2 + $0x23c] sm:$0xf]
    %v439 = vld [vmem:[%s4] sm:$0x7]
    %v441 = vlaneseq
    %v442 = vshrl.u32 %v441, 7
    %v443 = vsub.s32 0, %v442
    %v444 = vrot.slane %v439, %v443
    %v445 = vlaneseq
    %v446 = vshrl.u32 %v445, 7
    %v447 = vsub.s32 1, %v446
    %v448 = vrot.slane %v439, %v447
    %v449 = vlaneseq
    %v450 = vshrl.u32 %v449, 7
    %v451 = vsub.s32 2, %v450
    %v452 = vrot.slane %v439, %v451
    %v552 = vunpack.c.l.b16 %v343
    %v553 = vunpack.c.h.b16 %v343
    %v554 = vunpack.c.l.b16 %v344
    %v555 = vunpack.c.l.b16 %v345
    %v556 = vunpack.c.h.b16 %v345
    %v557 = vunpack.c.l.b16 %v346
    %v558 = vunpack.c.l.b16 %v347
    %v559 = vunpack.c.h.b16 %v347
    %v560 = vunpack.c.l.b16 %v348
    %v561 = vunpack.c.l.b16 %v349
    %v562 = vunpack.c.h.b16 %v349
    %v563 = vunpack.c.l.b16 %v350
    %v564 = vunpack.c.l.b16 %v351
    %v565 = vunpack.c.h.b16 %v351
    %v566 = vunpack.c.l.b16 %v352
    %v567 = vunpack.c.l.b16 %v353
    %v568 = vunpack.c.h.b16 %v353
    %v569 = vunpack.c.l.b16 %v354
    %v570 = vunpack.c.l.b16 %v355
    %v571 = vunpack.c.h.b16 %v355
    %v572 = vunpack.c.l.b16 %v356
    %v573 = vunpack.c.l.b16 %v357
    %v574 = vunpack.c.h.b16 %v357
    %v575 = vunpack.c.l.b16 %v358
    %v576 = vunpack.c.l.b16 %v359
    %v577 = vunpack.c.h.b16 %v359
    %v578 = vunpack.c.l.b16 %v360
    %v579 = vunpack.c.l.b16 %v361
    %v580 = vunpack.c.h.b16 %v361
    %v581 = vunpack.c.l.b16 %v362
    %v582 = vunpack.c.l.b16 %v363
    %v583 = vunpack.c.h.b16 %v363
    %v584 = vunpack.c.l.b16 %v364
    %v585 = vunpack.c.l.b16 %v365
    %v586 = vunpack.c.h.b16 %v365
    %v587 = vunpack.c.l.b16 %v366
    %v588 = vunpack.c.l.b16 %v367
    %v589 = vunpack.c.h.b16 %v367
    %v590 = vunpack.c.l.b16 %v368
    %v591 = vunpack.c.l.b16 %v369
    %v592 = vunpack.c.h.b16 %v369
    %v593 = vunpack.c.l.b16 %v370
    %v594 = vunpack.c.l.b16 %v371
    %v595 = vunpack.c.h.b16 %v371
    %v596 = vunpack.c.l.b16 %v372
    %v597 = vunpack.c.l.b16 %v373
    %v598 = vunpack.c.h.b16 %v373
    %v599 = vunpack.c.l.b16 %v374
    %v600 = vunpack.c.l.b16 %v375
    %v601 = vunpack.c.h.b16 %v375
    %v602 = vunpack.c.l.b16 %v376
    %v603 = vunpack.c.l.b16 %v377
    %v604 = vunpack.c.h.b16 %v377
    %v605 = vunpack.c.l.b16 %v378
    %v606 = vunpack.c.l.b16 %v379
    %v607 = vunpack.c.h.b16 %v379
    %v608 = vunpack.c.l.b16 %v380
    %v609 = vunpack.c.l.b16 %v381
    %v610 = vunpack.c.h.b16 %v381
    %v611 = vunpack.c.l.b16 %v382
    %v612 = vunpack.c.l.b16 %v383
    %v613 = vunpack.c.h.b16 %v383
    %v614 = vunpack.c.l.b16 %v384
    %v615 = vunpack.c.l.b16 %v385
    %v616 = vunpack.c.h.b16 %v385
    %v617 = vunpack.c.l.b16 %v386
    %v618 = vunpack.c.l.b16 %v387
    %v619 = vunpack.c.h.b16 %v387
    %v620 = vunpack.c.l.b16 %v388
    %v621 = vunpack.c.l.b16 %v389
    %v622 = vunpack.c.h.b16 %v389
    %v623 = vunpack.c.l.b16 %v390
    %v624 = vunpack.c.l.b16 %v391
    %v625 = vunpack.c.h.b16 %v391
    %v626 = vunpack.c.l.b16 %v392
    %v627 = vunpack.c.l.b16 %v393
    %v628 = vunpack.c.h.b16 %v393
    %v629 = vunpack.c.l.b16 %v394
    %v630 = vunpack.c.l.b16 %v395
    %v631 = vunpack.c.h.b16 %v395
    %v632 = vunpack.c.l.b16 %v396
    %v633 = vunpack.c.l.b16 %v397
    %v634 = vunpack.c.h.b16 %v397
    %v635 = vunpack.c.l.b16 %v398
    %v636 = vunpack.c.l.b16 %v399
    %v637 = vunpack.c.h.b16 %v399
    %v638 = vunpack.c.l.b16 %v400
    %v639 = vunpack.c.l.b16 %v401
    %v640 = vunpack.c.h.b16 %v401
    %v641 = vunpack.c.l.b16 %v402
    %v642 = vunpack.c.l.b16 %v403
    %v643 = vunpack.c.h.b16 %v403
    %v644 = vunpack.c.l.b16 %v404
    %v645 = vunpack.c.l.b16 %v405
    %v646 = vunpack.c.h.b16 %v405
    %v647 = vunpack.c.l.b16 %v406
    %v648 = vunpack.c.l.b16 %v407
    %v649 = vunpack.c.h.b16 %v407
    %v650 = vunpack.c.l.b16 %v408
    %v651 = vunpack.c.l.b16 %v409
    %v652 = vunpack.c.h.b16 %v409
    %v653 = vunpack.c.l.b16 %v410
    %v654 = vunpack.c.l.b16 %v411
    %v655 = vunpack.c.h.b16 %v411
    %v656 = vunpack.c.l.b16 %v412
    %v657 = vunpack.c.l.b16 %v413
    %v658 = vunpack.c.h.b16 %v413
    %v659 = vunpack.c.l.b16 %v414
    %v660 = vunpack.c.l.b16 %v415
    %v661 = vunpack.c.h.b16 %v415
    %v662 = vunpack.c.l.b16 %v416
    %v663 = vunpack.c.l.b16 %v417
    %v664 = vunpack.c.h.b16 %v417
    %v665 = vunpack.c.l.b16 %v418
    %v666 = vunpack.c.l.b16 %v419
    %v667 = vunpack.c.h.b16 %v419
    %v668 = vunpack.c.l.b16 %v420
    %v669 = vunpack.c.l.b16 %v421
    %v670 = vunpack.c.h.b16 %v421
    %v671 = vunpack.c.l.b16 %v422
    %v672 = vunpack.c.l.b16 %v423
    %v673 = vunpack.c.h.b16 %v423
    %v674 = vunpack.c.l.b16 %v424
    %v675 = vunpack.c.l.b16 %v425
    %v676 = vunpack.c.h.b16 %v425
    %v677 = vunpack.c.l.b16 %v426
    %v678 = vunpack.c.l.b16 %v427
    %v679 = vunpack.c.h.b16 %v427
    %v680 = vunpack.c.l.b16 %v428
    %v681 = vunpack.c.l.b16 %v429
    %v682 = vunpack.c.h.b16 %v429
    %v683 = vunpack.c.l.b16 %v430
    %v684 = vunpack.c.l.b16 %v431
    %v685 = vunpack.c.h.b16 %v431
    %v686 = vunpack.c.l.b16 %v432
    %v687 = vunpack.c.l.b16 %v433
    %v688 = vunpack.c.h.b16 %v433
    %v689 = vunpack.c.l.b16 %v434
    %v690 = vunpack.c.l.b16 %v435
    %v691 = vunpack.c.h.b16 %v435
    %v692 = vunpack.c.l.b16 %v436
    %v693 = vunpack.c.l.b16 %v437
    %v694 = vunpack.c.h.b16 %v437
    %v695 = vunpack.c.l.b16 %v438
    %v696 = vpack.c.b16 %v555, %v552
    %v697 = vpack.c.b16 %v556, %v553
    %v698 = vpack.c.b16 %v557, %v554
    %v699 = vpack.c.b16 %v561, %v558
    %v700 = vpack.c.b16 %v562, %v559
    %v701 = vpack.c.b16 %v563, %v560
    %v702 = vpack.c.b16 %v567, %v564
    %v703 = vpack.c.b16 %v568, %v565
    %v704 = vpack.c.b16 %v569, %v566
    %v705 = vpack.c.b16 %v573, %v570
    %v706 = vpack.c.b16 %v574, %v571
    %v707 = vpack.c.b16 %v575, %v572
    %v708 = vpack.c.b16 %v579, %v576
    %v709 = vpack.c.b16 %v580, %v577
    %v710 = vpack.c.b16 %v581, %v578
    %v711 = vpack.c.b16 %v585, %v582
    %v712 = vpack.c.b16 %v586, %v583
    %v713 = vpack.c.b16 %v587, %v584
    %v714 = vpack.c.b16 %v591, %v588
    %v715 = vpack.c.b16 %v592, %v589
    %v716 = vpack.c.b16 %v593, %v590
    %v717 = vpack.c.b16 %v597, %v594
    %v718 = vpack.c.b16 %v598, %v595
    %v719 = vpack.c.b16 %v599, %v596
    %v720 = vpack.c.b16 %v603, %v600
    %v721 = vpack.c.b16 %v604, %v601
    %v722 = vpack.c.b16 %v605, %v602
    %v723 = vpack.c.b16 %v609, %v606
    %v724 = vpack.c.b16 %v610, %v607
    %v725 = vpack.c.b16 %v611, %v608
    %v726 = vpack.c.b16 %v615, %v612
    %v727 = vpack.c.b16 %v616, %v613
    %v728 = vpack.c.b16 %v617, %v614
    %v729 = vpack.c.b16 %v621, %v618
    %v730 = vpack.c.b16 %v622, %v619
    %v731 = vpack.c.b16 %v623, %v620
    %v732 = vpack.c.b16 %v627, %v624
    %v733 = vpack.c.b16 %v628, %v625
    %v734 = vpack.c.b16 %v629, %v626
    %v735 = vpack.c.b16 %v633, %v630
    %v736 = vpack.c.b16 %v634, %v631
    %v737 = vpack.c.b16 %v635, %v632
    %v738 = vpack.c.b16 %v639, %v636
    %v739 = vpack.c.b16 %v640, %v637
    %v740 = vpack.c.b16 %v641, %v638
    %v741 = vpack.c.b16 %v645, %v642
    %v742 = vpack.c.b16 %v646, %v643
    %v743 = vpack.c.b16 %v647, %v644
    %v744 = vpack.c.b16 %v651, %v648
    %v745 = vpack.c.b16 %v652, %v649
    %v746 = vpack.c.b16 %v653, %v650
    %v747 = vpack.c.b16 %v657, %v654
    %v748 = vpack.c.b16 %v658, %v655
    %v749 = vpack.c.b16 %v659, %v656
    %v750 = vpack.c.b16 %v663, %v660
    %v751 = vpack.c.b16 %v664, %v661
    %v752 = vpack.c.b16 %v665, %v662
    %v753 = vpack.c.b16 %v669, %v666
    %v754 = vpack.c.b16 %v670, %v667
    %v755 = vpack.c.b16 %v671, %v668
    %v756 = vpack.c.b16 %v675, %v672
    %v757 = vpack.c.b16 %v676, %v673
    %v758 = vpack.c.b16 %v677, %v674
    %v759 = vpack.c.b16 %v681, %v678
    %v760 = vpack.c.b16 %v682, %v679
    %v761 = vpack.c.b16 %v683, %v680
    %v762 = vpack.c.b16 %v687, %v684
    %v763 = vpack.c.b16 %v688, %v685
    %v764 = vpack.c.b16 %v689, %v686
    %v765 = vpack.c.b16 %v693, %v690
    %v766 = vpack.c.b16 %v694, %v691
    %v767 = vpack.c.b16 %v695, %v692
    %840 = vmatprep.subr.bf16.mxu0 %v697
    %841 = vmatpush1.bf16.msra.mxu0 %v696
    %842 = vmatprep.subr.bf16.mxu0 %v700
    %843 = vmatpush1.bf16.msra.mxu0 %v699
    %844 = vmatprep.subr.bf16.mxu0 %v703
    %845 = vmatpush1.bf16.msra.mxu0 %v702
    %846 = vmatprep.subr.bf16.mxu0 %v706
    %847 = vmatpush1.bf16.msra.mxu0 %v705
    %848 = vmatprep.subr.bf16.mxu0 %v709
    %849 = vmatpush1.bf16.msra.mxu0 %v708
    %850 = vmatprep.subr.bf16.mxu0 %v712
    %851 = vmatpush1.bf16.msra.mxu0 %v711
    %852 = vmatprep.subr.bf16.mxu0 %v715
    %853 = vmatpush1.bf16.msra.mxu0 %v714
    %854 = vmatprep.subr.bf16.mxu0 %v718
    %855 = vmatpush1.bf16.msra.mxu0 %v717
    %856 = vmatprep.subr.bf16.mxu0 %v721
    %857 = vmatpush1.bf16.msra.mxu0 %v720
    %858 = vmatprep.subr.bf16.mxu0 %v724
    %859 = vmatpush1.bf16.msra.mxu0 %v723
    %860 = vmatprep.subr.bf16.mxu0 %v727
    %861 = vmatpush1.bf16.msra.mxu0 %v726
    %862 = vmatprep.subr.bf16.mxu0 %v730
    %863 = vmatpush1.bf16.msra.mxu0 %v729
    %864 = vmatprep.subr.bf16.mxu0 %v733
    %865 = vmatpush1.bf16.msra.mxu0 %v732
    %866 = vmatprep.subr.bf16.mxu0 %v736
    %867 = vmatpush1.bf16.msra.mxu0 %v735
    %868 = vmatprep.subr.bf16.mxu0 %v739
    %869 = vmatpush1.bf16.msra.mxu0 %v738
    %870 = vmatprep.subr.bf16.mxu0 %v742
    %871 = vmatpush1.bf16.msra.mxu0 %v741
    %872 = vmatprep.mubr.bf16.mxu0 %v341
    %873 = vmatmul.mubr.bf16.gmra.mrb[0].mxu0 %v340
    %v874 = vpop.f32.mrb[0].mxu0
    %v875 = vadd.f32 %v444, %v874
    %v876 = vpop.f32.mrb[0].mxu0
    %v877 = vadd.f32 %v448, %v876
    %v878 = vpop.f32.mrb[0].mxu0
    %v879 = vadd.f32 %v444, %v878
    %v880 = vpop.f32.mrb[0].mxu0
    %v881 = vadd.f32 %v448, %v880
    %882 = vdwg.mxu0
    %883 = vmatprep.subr.bf16.mxu0 %v745
    %884 = vmatpush1.bf16.msra.mxu0 %v744
    %885 = vmatprep.subr.bf16.mxu0 %v748
    %886 = vmatpush1.bf16.msra.mxu0 %v747
    %887 = vmatprep.subr.bf16.mxu0 %v751
    %888 = vmatpush1.bf16.msra.mxu0 %v750
    %889 = vmatprep.subr.bf16.mxu0 %v754
    %890 = vmatpush1.bf16.msra.mxu0 %v753
    %891 = vmatprep.subr.bf16.mxu0 %v757
    %892 = vmatpush1.bf16.msra.mxu0 %v756
    %893 = vmatprep.subr.bf16.mxu0 %v760
    %894 = vmatpush1.bf16.msra.mxu0 %v759
    %895 = vmatprep.subr.bf16.mxu0 %v763
    %896 = vmatpush1.bf16.msra.mxu0 %v762
    %897 = vmatprep.subr.bf16.mxu0 %v766
    %898 = vmatpush1.bf16.msra.mxu0 %v765
    %899 = vmatprep.subr.bf16.mxu0 0
    %900 = vmatpush1.bf16.msra.mxu0 0
    %901 = vmatprep.subr.bf16.mxu0 0
    %902 = vmatpush1.bf16.msra.mxu0 0
    %903 = vmatprep.subr.bf16.mxu0 0
    %904 = vmatpush1.bf16.msra.mxu0 0
    %905 = vmatprep.subr.bf16.mxu0 0
    %906 = vmatpush1.bf16.msra.mxu0 0
    %907 = vmatprep.subr.bf16.mxu0 0
    %908 = vmatpush1.bf16.msra.mxu0 0
    %909 = vmatprep.subr.bf16.mxu0 0
    %910 = vmatpush1.bf16.msra.mxu0 0
    %911 = vmatprep.subr.bf16.mxu0 0
    %912 = vmatpush1.bf16.msra.mxu0 0
    %913 = vmatprep.subr.bf16.mxu0 0
    %914 = vmatpush1.bf16.msra.mxu0 0
    %915 = vmatprep.mubr.bf16.mxu0 0
    %916 = vmatmul.mubr.bf16.gmra.mrb[0].mxu0 %v342
    %v917 = vpop.f32.mrb[0].mxu0
    %v918 = vadd.f32 %v875, %v917
    %v919 = vpop.f32.mrb[0].mxu0
    %v920 = vadd.f32 %v877, %v919
    %v921 = vpop.f32.mrb[0].mxu0
    %v922 = vadd.f32 %v879, %v921
    %v923 = vpop.f32.mrb[0].mxu0
    %v924 = vadd.f32 %v881, %v923
    %925 = vdwg.mxu0
    %926 = vmatprep.subr.bf16.mxu0 0
    %927 = vmatpush1.bf16.msra.mxu0 %v698
    %928 = vmatprep.subr.bf16.mxu0 0
    %929 = vmatpush1.bf16.msra.mxu0 %v701
    %930 = vmatprep.subr.bf16.mxu0 0
    %931 = vmatpush1.bf16.msra.mxu0 %v704
    %932 = vmatprep.subr.bf16.mxu0 0
    %933 = vmatpush1.bf16.msra.mxu0 %v707
    %934 = vmatprep.subr.bf16.mxu0 0
    %935 = vmatpush1.bf16.msra.mxu0 %v710
    %936 = vmatprep.subr.bf16.mxu0 0
    %937 = vmatpush1.bf16.msra.mxu0 %v713
    %938 = vmatprep.subr.bf16.mxu0 0
    %939 = vmatpush1.bf16.msra.mxu0 %v716
    %940 = vmatprep.subr.bf16.mxu0 0
    %941 = vmatpush1.bf16.msra.mxu0 %v719
    %942 = vmatprep.subr.bf16.mxu0 0
    %943 = vmatpush1.bf16.msra.mxu0 %v722
    %944 = vmatprep.subr.bf16.mxu0 0
    %945 = vmatpush1.bf16.msra.mxu0 %v725
    %946 = vmatprep.subr.bf16.mxu0 0
    %947 = vmatpush1.bf16.msra.mxu0 %v728
    %948 = vmatprep.subr.bf16.mxu0 0
    %949 = vmatpush1.bf16.msra.mxu0 %v731
    %950 = vmatprep.subr.bf16.mxu0 0
    %951 = vmatpush1.bf16.msra.mxu0 %v734
    %952 = vmatprep.subr.bf16.mxu0 0
    %953 = vmatpush1.bf16.msra.mxu0 %v737
    %954 = vmatprep.subr.bf16.mxu0 0
    %955 = vmatpush1.bf16.msra.mxu0 %v740
    %956 = vmatprep.subr.bf16.mxu0 0
    %957 = vmatpush1.bf16.msra.mxu0 %v743
    %958 = vmatprep.mubr.bf16.mxu0 %v341
    %959 = vmatmul.mubr.bf16.gmra.mrb[0].mxu0 %v340
    %v960 = vpop.f32.mrb[0].mxu0
    %v961 = vadd.f32 %v452, %v960
    %v962 = vpop.f32.mrb[0].mxu0
    %v963 = vpop.f32.mrb[0].mxu0
    %v964 = vadd.f32 %v452, %v963
    %v965 = vpop.f32.mrb[0].mxu0
    %966 = vdwg.mxu0
    %967 = vmatprep.subr.bf16.mxu0 0
    %968 = vmatpush1.bf16.msra.mxu0 %v746
    %969 = vmatprep.subr.bf16.mxu0 0
    %970 = vmatpush1.bf16.msra.mxu0 %v749
    %971 = vmatprep.subr.bf16.mxu0 0
    %972 = vmatpush1.bf16.msra.mxu0 %v752
    %973 = vmatprep.subr.bf16.mxu0 0
    %974 = vmatpush1.bf16.msra.mxu0 %v755
    %975 = vmatprep.subr.bf16.mxu0 0
    %976 = vmatpush1.bf16.msra.mxu0 %v758
    %977 = vmatprep.subr.bf16.mxu0 0
    %978 = vmatpush1.bf16.msra.mxu0 %v761
    %979 = vmatprep.subr.bf16.mxu0 0
    %980 = vmatpush1.bf16.msra.mxu0 %v764
    %981 = vmatprep.subr.bf16.mxu0 0
    %982 = vmatpush1.bf16.msra.mxu0 %v767
    %983 = vmatprep.subr.bf16.mxu0 0
    %984 = vmatpush1.bf16.msra.mxu0 0
    %985 = vmatprep.subr.bf16.mxu0 0
    %986 = vmatpush1.bf16.msra.mxu0 0
    %987 = vmatprep.subr.bf16.mxu0 0
    %988 = vmatpush1.bf16.msra.mxu0 0
    %989 = vmatprep.subr.bf16.mxu0 0
    %990 = vmatpush1.bf16.msra.mxu0 0
    %991 = vmatprep.subr.bf16.mxu0 0
    %992 = vmatpush1.bf16.msra.mxu0 0
    %993 = vmatprep.subr.bf16.mxu0 0
    %994 = vmatpush1.bf16.msra.mxu0 0
    %995 = vmatprep.subr.bf16.mxu0 0
    %996 = vmatpush1.bf16.msra.mxu0 0
    %997 = vmatprep.subr.bf16.mxu0 0
    %998 = vmatpush1.bf16.msra.mxu0 0
    %999 = vmatprep.mubr.bf16.mxu0 0
    %1000 = vmatmul.mubr.bf16.gmra.mrb[0].mxu0 %v342
    %v1001 = vpop.f32.mrb[0].mxu0
    %v1002 = vadd.f32 %v961, %v1001
    %v1003 = vpop.f32.mrb[0].mxu0
    %v1004 = vpop.f32.mrb[0].mxu0
    %v1005 = vadd.f32 %v964, %v1004
    %v1006 = vpop.f32.mrb[0].mxu0
    %1007 = vdwg.mxu0
    %v1008 = vmul.f32 %v918, 0.5
    %v1009 = vmul.f32 %v920, 0.5
    %v1010 = vmul.f32 %v1002, 0.5
    %v1011 = vmul.f32 %v922, 0.5
    %v1012 = vmul.f32 %v924, 0.5
    %v1013 = vmul.f32 %v1005, 0.5
    %v1014 = vtanh.pop %v1008
    %v1015 = vtanh.pop %v1009
    %v1016 = vtanh.pop %v1010
    %v1017 = vtanh.pop %v1011
    %v1018 = vtanh.pop %v1012
    %v1019 = vtanh.pop %v1013
    %v1020 = vmul.f32 %v1014, 0.5
    %v1021 = vmul.f32 %v1015, 0.5
    %v1022 = vmul.f32 %v1016, 0.5
    %v1023 = vmul.f32 %v1017, 0.5
    %v1024 = vmul.f32 %v1018, 0.5
    %v1025 = vmul.f32 %v1019, 0.5
    %v1026 = vadd.f32 %v1020, 0.5
    %v1027 = vadd.f32 %v1021, 0.5
    %v1028 = vadd.f32 %v1022, 0.5
    %v1029 = vadd.f32 %v1023, 0.5
    %v1030 = vadd.f32 %v1024, 0.5
    %v1031 = vadd.f32 %v1025, 0.5
    %v1032 = vmul.f32 %v918, %v1026
    %v1033 = vmul.f32 %v920, %v1027
    %v1034 = vmul.f32 %v1002, %v1028
    %v1035 = vmul.f32 %v922, %v1029
    %v1036 = vmul.f32 %v924, %v1030
    %v1037 = vmul.f32 %v1005, %v1031
    %v1038 = vpack.c.bf16 %v1035, %v1032
    %v1039 = vpack.c.bf16 %v1036, %v1033
    %v1040 = vpack.c.bf16 %v1037, %v1034
    %v1041 = vld [vmem:[%s5] sm:$0xf]
    %v1042 = vld [vmem:[%s5 + $0x4] sm:$0xf]
    %v1043 = vld [vmem:[%s5 + $0x8] sm:$0xf]
    %v1044 = vld [vmem:[%s5 + $0xc] sm:$0xf]
    %v1045 = vld [vmem:[%s5 + $0x10] sm:$0xf]
    %v1046 = vld [vmem:[%s5 + $0x14] sm:$0xf]
    %v1047 = vld [vmem:[%s5 + $0x18] sm:$0xf]
    %v1048 = vld [vmem:[%s5 + $0x1c] sm:$0xf]
    %v1049 = vld [vmem:[%s5 + $0x20] sm:$0xf]
    %v1050 = vld [vmem:[%s5 + $0x24] sm:$0xf]
    %v1051 = vld [vmem:[%s5 + $0x28] sm:$0xf]
    %v1052 = vld [vmem:[%s5 + $0x2c] sm:$0xf]
    %v1053 = vld [vmem:[%s5 + $0x30] sm:$0xf]
    %v1054 = vld [vmem:[%s5 + $0x34] sm:$0xf]
    %v1055 = vld [vmem:[%s5 + $0x38] sm:$0xf]
    %v1056 = vld [vmem:[%s5 + $0x3c] sm:$0xf]
    %v1057 = vld [vmem:[%s5 + $0x40] sm:$0xf]
    %v1058 = vld [vmem:[%s5 + $0x44] sm:$0xf]
    %v1059 = vld [vmem:[%s5 + $0x48] sm:$0xf]
    %v1060 = vld [vmem:[%s5 + $0x4c] sm:$0xf]
    %v1061 = vld [vmem:[%s5 + $0x50] sm:$0xf]
    %v1062 = vld [vmem:[%s5 + $0x54] sm:$0xf]
    %v1063 = vld [vmem:[%s5 + $0x58] sm:$0xf]
    %v1064 = vld [vmem:[%s5 + $0x5c] sm:$0xf]
    %v1065 = vld [vmem:[%s5 + $0x60] sm:$0xf]
    %v1066 = vld [vmem:[%s5 + $0x64] sm:$0xf]
    %v1067 = vld [vmem:[%s5 + $0x68] sm:$0xf]
    %v1068 = vld [vmem:[%s5 + $0x6c] sm:$0xf]
    %v1069 = vld [vmem:[%s5 + $0x70] sm:$0xf]
    %v1070 = vld [vmem:[%s5 + $0x74] sm:$0xf]
    %v1071 = vld [vmem:[%s5 + $0x78] sm:$0xf]
    %v1072 = vld [vmem:[%s5 + $0x7c] sm:$0xf]
    %v1073 = vld [vmem:[%s5 + $0x80] sm:$0xf]
    %v1074 = vld [vmem:[%s5 + $0x84] sm:$0xf]
    %v1075 = vld [vmem:[%s5 + $0x88] sm:$0xf]
    %v1076 = vld [vmem:[%s5 + $0x8c] sm:$0xf]
    %v1077 = vld [vmem:[%s5 + $0x90] sm:$0xf]
    %v1078 = vld [vmem:[%s5 + $0x94] sm:$0xf]
    %v1079 = vld [vmem:[%s5 + $0x98] sm:$0xf]
    %v1080 = vld [vmem:[%s5 + $0x9c] sm:$0xf]
    %v1081 = vld [vmem:[%s5 + $0xa0] sm:$0xf]
    %v1082 = vld [vmem:[%s5 + $0xa4] sm:$0xf]
    %v1083 = vld [vmem:[%s5 + $0xa8] sm:$0xf]
    %v1084 = vld [vmem:[%s5 + $0xac] sm:$0xf]
    %v1085 = vld [vmem:[%s5 + $0xb0] sm:$0xf]
    %v1086 = vld [vmem:[%s5 + $0xb4] sm:$0xf]
    %v1087 = vld [vmem:[%s5 + $0xb8] sm:$0xf]
    %v1088 = vld [vmem:[%s5 + $0xbc] sm:$0xf]
    %v1089 = vld [vmem:[%s6] sm:$0x1]
    %v1091 = vlaneseq
    %v1092 = vshrl.u32 %v1091, 7
    %v1093 = vsub.s32 0, %v1092
    %v1094 = vrot.slane %v1089, %v1093
    %v1144 = vunpack.c.l.b16 %v1041
    %v1145 = vunpack.c.l.b16 %v1042
    %v1146 = vunpack.c.l.b16 %v1043
    %v1147 = vunpack.c.l.b16 %v1044
    %v1148 = vunpack.c.l.b16 %v1045
    %v1149 = vunpack.c.l.b16 %v1046
    %v1150 = vunpack.c.l.b16 %v1047
    %v1151 = vunpack.c.l.b16 %v1048
    %v1152 = vunpack.c.l.b16 %v1049
    %v1153 = vunpack.c.l.b16 %v1050
    %v1154 = vunpack.c.l.b16 %v1051
    %v1155 = vunpack.c.l.b16 %v1052
    %v1156 = vunpack.c.l.b16 %v1053
    %v1157 = vunpack.c.l.b16 %v1054
    %v1158 = vunpack.c.l.b16 %v1055
    %v1159 = vunpack.c.l.b16 %v1056
    %v1160 = vunpack.c.l.b16 %v1057
    %v1161 = vunpack.c.l.b16 %v1058
    %v1162 = vunpack.c.l.b16 %v1059
    %v1163 = vunpack.c.l.b16 %v1060
    %v1164 = vunpack.c.l.b16 %v1061
    %v1165 = vunpack.c.l.b16 %v1062
    %v1166 = vunpack.c.l.b16 %v1063
    %v1167 = vunpack.c.l.b16 %v1064
    %v1168 = vunpack.c.l.b16 %v1065
    %v1169 = vunpack.c.l.b16 %v1066
    %v1170 = vunpack.c.l.b16 %v1067
    %v1171 = vunpack.c.l.b16 %v1068
    %v1172 = vunpack.c.l.b16 %v1069
    %v1173 = vunpack.c.l.b16 %v1070
    %v1174 = vunpack.c.l.b16 %v1071
    %v1175 = vunpack.c.l.b16 %v1072
    %v1176 = vunpack.c.l.b16 %v1073
    %v1177 = vunpack.c.l.b16 %v1074
    %v1178 = vunpack.c.l.b16 %v1075
    %v1179 = vunpack.c.l.b16 %v1076
    %v1180 = vunpack.c.l.b16 %v1077
    %v1181 = vunpack.c.l.b16 %v1078
    %v1182 = vunpack.c.l.b16 %v1079
    %v1183 = vunpack.c.l.b16 %v1080
    %v1184 = vunpack.c.l.b16 %v1081
    %v1185 = vunpack.c.l.b16 %v1082
    %v1186 = vunpack.c.l.b16 %v1083
    %v1187 = vunpack.c.l.b16 %v1084
    %v1188 = vunpack.c.l.b16 %v1085
    %v1189 = vunpack.c.l.b16 %v1086
    %v1190 = vunpack.c.l.b16 %v1087
    %v1191 = vunpack.c.l.b16 %v1088
    %v1192 = vpack.c.b16 %v1145, %v1144
    %v1193 = vpack.c.b16 %v1147, %v1146
    %v1194 = vpack.c.b16 %v1149, %v1148
    %v1195 = vpack.c.b16 %v1151, %v1150
    %v1196 = vpack.c.b16 %v1153, %v1152
    %v1197 = vpack.c.b16 %v1155, %v1154
    %v1198 = vpack.c.b16 %v1157, %v1156
    %v1199 = vpack.c.b16 %v1159, %v1158
    %v1200 = vpack.c.b16 %v1161, %v1160
    %v1201 = vpack.c.b16 %v1163, %v1162
    %v1202 = vpack.c.b16 %v1165, %v1164
    %v1203 = vpack.c.b16 %v1167, %v1166
    %v1204 = vpack.c.b16 %v1169, %v1168
    %v1205 = vpack.c.b16 %v1171, %v1170
    %v1206 = vpack.c.b16 %v1173, %v1172
    %v1207 = vpack.c.b16 %v1175, %v1174
    %v1208 = vpack.c.b16 %v1177, %v1176
    %v1209 = vpack.c.b16 %v1179, %v1178
    %v1210 = vpack.c.b16 %v1181, %v1180
    %v1211 = vpack.c.b16 %v1183, %v1182
    %v1212 = vpack.c.b16 %v1185, %v1184
    %v1213 = vpack.c.b16 %v1187, %v1186
    %v1214 = vpack.c.b16 %v1189, %v1188
    %v1215 = vpack.c.b16 %v1191, %v1190
    %1240 = vmatprep.subr.bf16.mxu0 0
    %1241 = vmatpush1.bf16.msra.mxu0 %v1192
    %1242 = vmatprep.subr.bf16.mxu0 0
    %1243 = vmatpush1.bf16.msra.mxu0 %v1193
    %1244 = vmatprep.subr.bf16.mxu0 0
    %1245 = vmatpush1.bf16.msra.mxu0 %v1194
    %1246 = vmatprep.subr.bf16.mxu0 0
    %1247 = vmatpush1.bf16.msra.mxu0 %v1195
    %1248 = vmatprep.subr.bf16.mxu0 0
    %1249 = vmatpush1.bf16.msra.mxu0 %v1196
    %1250 = vmatprep.subr.bf16.mxu0 0
    %1251 = vmatpush1.bf16.msra.mxu0 %v1197
    %1252 = vmatprep.subr.bf16.mxu0 0
    %1253 = vmatpush1.bf16.msra.mxu0 %v1198
    %1254 = vmatprep.subr.bf16.mxu0 0
    %1255 = vmatpush1.bf16.msra.mxu0 %v1199
    %1256 = vmatprep.subr.bf16.mxu0 0
    %1257 = vmatpush1.bf16.msra.mxu0 %v1200
    %1258 = vmatprep.subr.bf16.mxu0 0
    %1259 = vmatpush1.bf16.msra.mxu0 %v1201
    %1260 = vmatprep.subr.bf16.mxu0 0
    %1261 = vmatpush1.bf16.msra.mxu0 %v1202
    %1262 = vmatprep.subr.bf16.mxu0 0
    %1263 = vmatpush1.bf16.msra.mxu0 %v1203
    %1264 = vmatprep.subr.bf16.mxu0 0
    %1265 = vmatpush1.bf16.msra.mxu0 %v1204
    %1266 = vmatprep.subr.bf16.mxu0 0
    %1267 = vmatpush1.bf16.msra.mxu0 %v1205
    %1268 = vmatprep.subr.bf16.mxu0 0
    %1269 = vmatpush1.bf16.msra.mxu0 %v1206
    %1270 = vmatprep.subr.bf16.mxu0 0
    %1271 = vmatpush1.bf16.msra.mxu0 %v1207
    %1272 = vmatprep.mubr.bf16.mxu0 %v1039
    %1273 = vmatmul.mubr.bf16.gmra.mrb[0].mxu0 %v1038
    %v1274 = vpop.f32.mrb[0].mxu0
    %v1275 = vadd.f32 %v1094, %v1274
    %v1276 = vpop.f32.mrb[0].mxu0
    %v1277 = vpop.f32.mrb[0].mxu0
    %v1278 = vadd.f32 %v1094, %v1277
    %v1279 = vpop.f32.mrb[0].mxu0
    %1280 = vdwg.mxu0
    %1281 = vmatprep.subr.bf16.mxu0 0
    %1282 = vmatpush1.bf16.msra.mxu0 %v1208
    %1283 = vmatprep.subr.bf16.mxu0 0
    %1284 = vmatpush1.bf16.msra.mxu0 %v1209
    %1285 = vmatprep.subr.bf16.mxu0 0
    %1286 = vmatpush1.bf16.msra.mxu0 %v1210
    %1287 = vmatprep.subr.bf16.mxu0 0
    %1288 = vmatpush1.bf16.msra.mxu0 %v1211
    %1289 = vmatprep.subr.bf16.mxu0 0
    %1290 = vmatpush1.bf16.msra.mxu0 %v1212
    %1291 = vmatprep.subr.bf16.mxu0 0
    %1292 = vmatpush1.bf16.msra.mxu0 %v1213
    %1293 = vmatprep.subr.bf16.mxu0 0
    %1294 = vmatpush1.bf16.msra.mxu0 %v1214
    %1295 = vmatprep.subr.bf16.mxu0 0
    %1296 = vmatpush1.bf16.msra.mxu0 %v1215
    %1297 = vmatprep.subr.bf16.mxu0 0
    %1298 = vmatpush1.bf16.msra.mxu0 0
    %1299 = vmatprep.subr.bf16.mxu0 0
    %1300 = vmatpush1.bf16.msra.mxu0 0
    %1301 = vmatprep.subr.bf16.mxu0 0
    %1302 = vmatpush1.bf16.msra.mxu0 0
    %1303 = vmatprep.subr.bf16.mxu0 0
    %1304 = vmatpush1.bf16.msra.mxu0 0
    %1305 = vmatprep.subr.bf16.mxu0 0
    %1306 = vmatpush1.bf16.msra.mxu0 0
    %1307 = vmatprep.subr.bf16.mxu0 0
    %1308 = vmatpush1.bf16.msra.mxu0 0
    %1309 = vmatprep.subr.bf16.mxu0 0
    %1310 = vmatpush1.bf16.msra.mxu0 0
    %1311 = vmatprep.subr.bf16.mxu0 0
    %1312 = vmatpush1.bf16.msra.mxu0 0
    %1313 = vmatprep.mubr.bf16.mxu0 0
    %1314 = vmatmul.mubr.bf16.gmra.mrb[0].mxu0 %v1040
    %v1315 = vpop.f32.mrb[0].mxu0
    %v1316 = vadd.f32 %v1275, %v1315
    %v1317 = vpop.f32.mrb[0].mxu0
    %v1318 = vpop.f32.mrb[0].mxu0
    %v1319 = vadd.f32 %v1278, %v1318
    %v1320 = vpop.f32.mrb[0].mxu0
    %1321 = vdwg.mxu0
    %vm1322 = vcmask 64512
    %1323 = vst.msk [vmem:[%s7] sm:$0xff] %vm1322, %v1316
    %1324 = vst.msk [vmem:[%s7 + $0x8] sm:$0xff] %vm1322, %v1319
    // Predicated region
    $region34: #{gnpoolswish_forward.2} parent=1 // pred_check
      _
    $region35: #{gnpoolswish_forward.2} parent=1 // pred_check_branch
      %1326 = sbr.rel (0) target = $region37
    $region36: #{gnpoolswish_forward.2} parent=1 // pred_region
      _
    $region37: #{gnpoolswish_forward.2} parent=1 // pred_fallthru
      _
    // Predicated region
    $region38: #{gnpoolswish_forward.2} parent=1 // pred_check
      _
    $region39: #{gnpoolswish_forward.2} parent=1 // pred_check_branch
      %1328 = sbr.rel (0) target = $region41
    $region40: #{gnpoolswish_forward.2} parent=1 // pred_region
      _
    $region41: #{gnpoolswish_forward.2} parent=1 // pred_fallthru
      _
    %1329 = vsyncpa [#allocation3], 1

</llo_original>
